<compile_context>
chip_gen: v7x
topology: tpu7x:2x2x1
jax: 0.10.0
libtpu: 0.0.40
codegen_flags: <defaults>
</compile_context>

<pallas_src>
import functools

import jax
import jax.numpy as jnp
from jax.experimental import pallas as pl
from jax.experimental.pallas import tpu as pltpu


def _eca_kernel(w_ref, x_ref, o_ref, band_ref, *, inv_hw):
    """One grid step = NB batch elements, fully fused ECA.

    w_ref:    (k,)   f32 in SMEM       -- Conv1d weights
    x_ref:    (NB, C, HW_pad) in VMEM  -- input tile (channels on sublanes)
    o_ref:    (NB, C, HW_pad) in VMEM  -- output tile
    band_ref: (C, C) f32 VMEM scratch  -- band matrix rebuilt each step
    """
    nb, C, _ = x_ref.shape
    k = w_ref.shape[0]
    pad = (k - 1) // 2

    # Build the band matrix from the (k,) SMEM weights: band[c, j] = w[j-c+pad]
    # inside the band, 0 elsewhere, so band @ pooled == zero-padded Conv1d.
    # (~k selects over 16 vregs at C=128 — negligible, recomputed every step so
    # it is correct under megacore grid sharding.)
    c_idx = jax.lax.broadcasted_iota(jnp.int32, (C, C), 0)
    j_idx = jax.lax.broadcasted_iota(jnp.int32, (C, C), 1)
    tap = j_idx - c_idx + pad
    band = jnp.zeros((C, C), jnp.float32)
    for i in range(k):
        band = jnp.where(tap == i, w_ref[i], band)
    band_ref[...] = band

    # Per batch element: pool -> channel conv -> sigmoid -> scale.
    # x_ref is read separately for the reduction and the multiply so the whole
    # (C, HW) tile is never held live in vregs across the conv/sigmoid chain.
    for n in range(nb):
        pooled = jnp.sum(x_ref[n].astype(jnp.float32), axis=1,
                         keepdims=True) * inv_hw                    # (C, 1)
        y = jnp.dot(band_ref[...], pooled,
                    preferred_element_type=jnp.float32)             # (C, 1)
        scale = 1.0 / (1.0 + jnp.exp(-y))                           # sigmoid
        o_ref[n] = (x_ref[n].astype(jnp.float32) * scale).astype(o_ref.dtype)


def _choose_block_batch(n, bytes_per_item, target_bytes=1 << 20, max_nb=16):
    """Pick how many batch elements to pack per grid step."""
    nb = max(1, min(max_nb, target_bytes // max(1, bytes_per_item)))
    if n >= 2:
        nb = min(nb, n // 2)      # keep grid length >= 2 for v7x's two TCs
    nb = max(1, min(nb, n))
    while n % nb:                 # must divide N exactly
        nb -= 1
    return nb


def eca_forward(x_nchw, conv_w):
    """x_nchw: (N, C, H, W) (PyTorch NCHW layout), conv_w: (k,) Conv1d weight."""
    N, C, H, W = x_nchw.shape
    k = conv_w.shape[0]
    assert k % 2 == 1, "ECA uses odd kernel sizes"
    HW = H * W
    HW_pad = ((HW + 127) // 128) * 128          # lane-dense stores for any H, W

    x2 = x_nchw.reshape(N, C, HW)               # free, contiguous reshape of NCHW
    if HW_pad != HW:
        x2 = jnp.pad(x2, ((0, 0), (0, 0), (0, HW_pad - HW)))

    bytes_per_n = C * HW_pad * x2.dtype.itemsize
    nb = _choose_block_batch(N, bytes_per_n)
    grid = (N // nb,)

    # in + out, double-buffered, plus the band scratch; explicit limit so larger
    # blocks never trip the default scoped-VMEM limit (16 MiB on v5e).
    vmem_need = 4 * nb * bytes_per_n + C * C * 4 + (1 << 20)
    vmem_limit = int(min(64 << 20, max(16 << 20, 2 * vmem_need)))

    out = pl.pallas_call(
        functools.partial(_eca_kernel, inv_hw=1.0 / HW),
        out_shape=jax.ShapeDtypeStruct((N, C, HW_pad), x_nchw.dtype),
        grid=grid,
        in_specs=[
            pl.BlockSpec(memory_space=pltpu.MemorySpace.SMEM),      # conv_w (k,)
            pl.BlockSpec((nb, C, HW_pad), lambda g: (g, 0, 0)),     # x tile
        ],
        out_specs=pl.BlockSpec((nb, C, HW_pad), lambda g: (g, 0, 0)),
        scratch_shapes=[pltpu.VMEM((C, C), jnp.float32)],
        compiler_params=pltpu.CompilerParams(
            dimension_semantics=("parallel",),
            vmem_limit_bytes=vmem_limit),
    )(conv_w.astype(jnp.float32), x2)

    return out[:, :, :HW].reshape(N, C, H, W)


# ----------------------------------------------------------------------------
# Pure-JAX reference (mirrors the PyTorch ECA forward).
# ----------------------------------------------------------------------------
def eca_ref(x_nchw, conv_w):
    N, C, H, W = x_nchw.shape
    k = conv_w.shape[0]
    pad = (k - 1) // 2
    pooled = jnp.mean(x_nchw, axis=(2, 3))                    # (N, C)
    p = jnp.pad(pooled, ((0, 0), (pad, pad)))
    y = sum(conv_w[i] * p[:, i:i + C] for i in range(k))      # (N, C)
    scale = jax.nn.sigmoid(y)
    return x_nchw * scale[:, :, None, None]


# ----------------------------------------------------------------------------
if __name__ == "__main__":
    key = jax.random.PRNGKey(0)
    k_x, k_w = jax.random.split(key)

    # N=8 so the batched kernel runs with NB=4 and a 2-step parallel grid.
    N, C, H, W, K_SIZE = 8, 128, 16, 16, 3
    x = jax.random.normal(k_x, (N, C, H, W), jnp.float32)     # NCHW like PyTorch
    conv_w = jax.random.normal(k_w, (K_SIZE,), jnp.float32) * 0.5

    out = jax.block_until_ready(eca_forward(x, conv_w))
    ref = jax.block_until_ready(eca_ref(x, conv_w))

    assert out.shape == (N, C, H, W), out.shape
    assert jnp.allclose(out, ref, atol=1e-4, rtol=1e-4), "mismatch vs JAX reference"
    print("KERNEL_OK")
</pallas_src>

<mosaic_0001>
module attributes {stable_mosaic.version = 11 : i64} {
  func.func @_eca_kernel(%arg0: i32, %arg1: memref<3xf32, #tpu.memory_space<smem>>, %arg2: memref<4x128x256xf32, #tpu.memory_space<vmem>>, %arg3: memref<4x128x256xf32, #tpu.memory_space<vmem>>, %arg4: memref<128x128xf32, #tpu.memory_space<vmem>>) attributes {dimension_semantics = [#tpu.dimension_semantics<parallel>], iteration_bounds = array<i64: 2>, scalar_prefetch = 0 : i64, scratch_operands = 1 : i64, tpu.core_type = #tpu.core_type<tc>, window_params = [{transform_indices = @transform_0, window_bounds = array<i64: 3>}, {transform_indices = @transform_1, window_bounds = array<i64: 4, 128, 256>}, {transform_indices = @transform_2, window_bounds = array<i64: 4, 128, 256>}]} {
    %0 = tpu.iota {dimensions = array<i32: 0>} : vector<128x128xi32>
    %1 = tpu.iota {dimensions = array<i32: 1>} : vector<128x128xi32>
    %2 = arith.subi %1, %0 : vector<128x128xi32>
    %c1_i32 = arith.constant 1 : i32
    %3 = vector.broadcast %c1_i32 : i32 to vector<128x128xi32>
    %4 = arith.addi %2, %3 : vector<128x128xi32>
    %cst = arith.constant 0.000000e+00 : f32
    %5 = vector.broadcast %cst : f32 to vector<128x128xf32>
    %c0_i32 = arith.constant 0 : i32
    %6 = vector.broadcast %c0_i32 : i32 to vector<128x128xi32>
    %7 = arith.cmpi eq, %4, %6 : vector<128x128xi32>
    %c0 = arith.constant 0 : index
    %8 = memref.load %arg1[%c0] : memref<3xf32, #tpu.memory_space<smem>>
    %9 = vector.broadcast %8 : f32 to vector<128x128xf32>
    %10 = arith.select %7, %9, %5 : vector<128x128xi1>, vector<128x128xf32>
    %c1_i32_0 = arith.constant 1 : i32
    %11 = vector.broadcast %c1_i32_0 : i32 to vector<128x128xi32>
    %12 = arith.cmpi eq, %4, %11 : vector<128x128xi32>
    %c1 = arith.constant 1 : index
    %13 = memref.load %arg1[%c1] : memref<3xf32, #tpu.memory_space<smem>>
    %14 = vector.broadcast %13 : f32 to vector<128x128xf32>
    %15 = arith.select %12, %14, %10 : vector<128x128xi1>, vector<128x128xf32>
    %c2_i32 = arith.constant 2 : i32
    %16 = vector.broadcast %c2_i32 : i32 to vector<128x128xi32>
    %17 = arith.cmpi eq, %4, %16 : vector<128x128xi32>
    %c2 = arith.constant 2 : index
    %18 = memref.load %arg1[%c2] : memref<3xf32, #tpu.memory_space<smem>>
    %19 = vector.broadcast %18 : f32 to vector<128x128xf32>
    %20 = arith.select %17, %19, %15 : vector<128x128xi1>, vector<128x128xf32>
    %c0_1 = arith.constant 0 : index
    %c0_2 = arith.constant 0 : index
    %21 = vector.load %arg4[%c0_1, %c0_2] : memref<128x128xf32, #tpu.memory_space<vmem>>, vector<128x128xf32>
    tpu.vector_store %arg4[%c0_1, %c0_2], %20 {strides = array<i32>} : memref<128x128xf32, #tpu.memory_space<vmem>>, vector<128x128xf32>,
    %c0_3 = arith.constant 0 : index
    %c0_4 = arith.constant 0 : index
    %c0_5 = arith.constant 0 : index
    %22 = vector.load %arg2[%c0_3, %c0_4, %c0_5] : memref<4x128x256xf32, #tpu.memory_space<vmem>>, vector<1x128x256xf32>
    %23 = vector.shape_cast %22 : vector<1x128x256xf32> to vector<128x256xf32>
    %cst_6 = arith.constant dense<0.000000e+00> : vector<128xf32>
    %24 = vector.multi_reduction <add>, %23, %cst_6 [1] : vector<128x256xf32> to vector<128xf32>
    %25 = vector.shape_cast %24 : vector<128xf32> to vector<128x1xf32>
    %cst_7 = arith.constant 3.906250e-03 : f32
    %26 = vector.broadcast %cst_7 : f32 to vector<128x1xf32>
    %27 = arith.mulf %25, %26 : vector<128x1xf32>
    %c0_8 = arith.constant 0 : index
    %c0_9 = arith.constant 0 : index
    %28 = vector.load %arg4[%c0_8, %c0_9] : memref<128x128xf32, #tpu.memory_space<vmem>>, vector<128x128xf32>
    %cst_10 = arith.constant dense<0.000000e+00> : vector<128x1xf32>
    %29 = tpu.matmul %28, %27, %cst_10 {dimension_numbers = #tpu.dot_dimension_numbers<[1], [0], [0], [1], [0, 0, 1, 1], [], []>} : vector<128x128xf32>, vector<128x1xf32>, vector<128x1xf32> -> vector<128x1xf32>
    %cst_11 = arith.constant 0.000000e+00 : f32
    %30 = vector.broadcast %cst_11 : f32 to vector<128x1xf32>
    %31 = arith.subf %30, %29 : vector<128x1xf32>
    %32 = math.exp %31 : vector<128x1xf32>
    %cst_12 = arith.constant 1.000000e+00 : f32
    %33 = vector.broadcast %cst_12 : f32 to vector<128x1xf32>
    %34 = arith.addf %33, %32 : vector<128x1xf32>
    %cst_13 = arith.constant 1.000000e+00 : f32
    %35 = vector.broadcast %cst_13 : f32 to vector<128x1xf32>
    %36 = arith.divf %35, %34 : vector<128x1xf32>
    %c0_14 = arith.constant 0 : index
    %c0_15 = arith.constant 0 : index
    %c0_16 = arith.constant 0 : index
    %37 = vector.load %arg2[%c0_14, %c0_15, %c0_16] : memref<4x128x256xf32, #tpu.memory_space<vmem>>, vector<1x128x256xf32>
    %38 = vector.shape_cast %37 : vector<1x128x256xf32> to vector<128x256xf32>
    %39 = vector.broadcast %36 : vector<128x1xf32> to vector<128x256xf32>
    %40 = arith.mulf %38, %39 : vector<128x256xf32>
    %c0_17 = arith.constant 0 : index
    %c0_18 = arith.constant 0 : index
    %c0_19 = arith.constant 0 : index
    %41 = vector.load %arg3[%c0_17, %c0_18, %c0_19] : memref<4x128x256xf32, #tpu.memory_space<vmem>>, vector<1x128x256xf32>
    %42 = vector.shape_cast %41 : vector<1x128x256xf32> to vector<128x256xf32>
    %43 = vector.shape_cast %40 : vector<128x256xf32> to vector<1x128x256xf32>
    tpu.vector_store %arg3[%c0_17, %c0_18, %c0_19], %43 {strides = array<i32>} : memref<4x128x256xf32, #tpu.memory_space<vmem>>, vector<1x128x256xf32>,
    %c1_20 = arith.constant 1 : index
    %c0_21 = arith.constant 0 : index
    %c0_22 = arith.constant 0 : index
    %44 = vector.load %arg2[%c1_20, %c0_21, %c0_22] : memref<4x128x256xf32, #tpu.memory_space<vmem>>, vector<1x128x256xf32>
    %45 = vector.shape_cast %44 : vector<1x128x256xf32> to vector<128x256xf32>
    %cst_23 = arith.constant dense<0.000000e+00> : vector<128xf32>
    %46 = vector.multi_reduction <add>, %45, %cst_23 [1] : vector<128x256xf32> to vector<128xf32>
    %47 = vector.shape_cast %46 : vector<128xf32> to vector<128x1xf32>
    %cst_24 = arith.constant 3.906250e-03 : f32
    %48 = vector.broadcast %cst_24 : f32 to vector<128x1xf32>
    %49 = arith.mulf %47, %48 : vector<128x1xf32>
    %c0_25 = arith.constant 0 : index
    %c0_26 = arith.constant 0 : index
    %50 = vector.load %arg4[%c0_25, %c0_26] : memref<128x128xf32, #tpu.memory_space<vmem>>, vector<128x128xf32>
    %cst_27 = arith.constant dense<0.000000e+00> : vector<128x1xf32>
    %51 = tpu.matmul %50, %49, %cst_27 {dimension_numbers = #tpu.dot_dimension_numbers<[1], [0], [0], [1], [0, 0, 1, 1], [], []>} : vector<128x128xf32>, vector<128x1xf32>, vector<128x1xf32> -> vector<128x1xf32>
    %cst_28 = arith.constant 0.000000e+00 : f32
    %52 = vector.broadcast %cst_28 : f32 to vector<128x1xf32>
    %53 = arith.subf %52, %51 : vector<128x1xf32>
    %54 = math.exp %53 : vector<128x1xf32>
    %cst_29 = arith.constant 1.000000e+00 : f32
    %55 = vector.broadcast %cst_29 : f32 to vector<128x1xf32>
    %56 = arith.addf %55, %54 : vector<128x1xf32>
    %cst_30 = arith.constant 1.000000e+00 : f32
    %57 = vector.broadcast %cst_30 : f32 to vector<128x1xf32>
    %58 = arith.divf %57, %56 : vector<128x1xf32>
    %c1_31 = arith.constant 1 : index
    %c0_32 = arith.constant 0 : index
    %c0_33 = arith.constant 0 : index
    %59 = vector.load %arg2[%c1_31, %c0_32, %c0_33] : memref<4x128x256xf32, #tpu.memory_space<vmem>>, vector<1x128x256xf32>
    %60 = vector.shape_cast %59 : vector<1x128x256xf32> to vector<128x256xf32>
    %61 = vector.broadcast %58 : vector<128x1xf32> to vector<128x256xf32>
    %62 = arith.mulf %60, %61 : vector<128x256xf32>
    %c1_34 = arith.constant 1 : index
    %c0_35 = arith.constant 0 : index
    %c0_36 = arith.constant 0 : index
    %63 = vector.load %arg3[%c1_34, %c0_35, %c0_36] : memref<4x128x256xf32, #tpu.memory_space<vmem>>, vector<1x128x256xf32>
    %64 = vector.shape_cast %63 : vector<1x128x256xf32> to vector<128x256xf32>
    %65 = vector.shape_cast %62 : vector<128x256xf32> to vector<1x128x256xf32>
    tpu.vector_store %arg3[%c1_34, %c0_35, %c0_36], %65 {strides = array<i32>} : memref<4x128x256xf32, #tpu.memory_space<vmem>>, vector<1x128x256xf32>,
    %c2_37 = arith.constant 2 : index
    %c0_38 = arith.constant 0 : index
    %c0_39 = arith.constant 0 : index
    %66 = vector.load %arg2[%c2_37, %c0_38, %c0_39] : memref<4x128x256xf32, #tpu.memory_space<vmem>>, vector<1x128x256xf32>
    %67 = vector.shape_cast %66 : vector<1x128x256xf32> to vector<128x256xf32>
    %cst_40 = arith.constant dense<0.000000e+00> : vector<128xf32>
    %68 = vector.multi_reduction <add>, %67, %cst_40 [1] : vector<128x256xf32> to vector<128xf32>
    %69 = vector.shape_cast %68 : vector<128xf32> to vector<128x1xf32>
    %cst_41 = arith.constant 3.906250e-03 : f32
    %70 = vector.broadcast %cst_41 : f32 to vector<128x1xf32>
    %71 = arith.mulf %69, %70 : vector<128x1xf32>
    %c0_42 = arith.constant 0 : index
    %c0_43 = arith.constant 0 : index
    %72 = vector.load %arg4[%c0_42, %c0_43] : memref<128x128xf32, #tpu.memory_space<vmem>>, vector<128x128xf32>
    %cst_44 = arith.constant dense<0.000000e+00> : vector<128x1xf32>
    %73 = tpu.matmul %72, %71, %cst_44 {dimension_numbers = #tpu.dot_dimension_numbers<[1], [0], [0], [1], [0, 0, 1, 1], [], []>} : vector<128x128xf32>, vector<128x1xf32>, vector<128x1xf32> -> vector<128x1xf32>
    %cst_45 = arith.constant 0.000000e+00 : f32
    %74 = vector.broadcast %cst_45 : f32 to vector<128x1xf32>
    %75 = arith.subf %74, %73 : vector<128x1xf32>
    %76 = math.exp %75 : vector<128x1xf32>
    %cst_46 = arith.constant 1.000000e+00 : f32
    %77 = vector.broadcast %cst_46 : f32 to vector<128x1xf32>
    %78 = arith.addf %77, %76 : vector<128x1xf32>
    %cst_47 = arith.constant 1.000000e+00 : f32
    %79 = vector.broadcast %cst_47 : f32 to vector<128x1xf32>
    %80 = arith.divf %79, %78 : vector<128x1xf32>
    %c2_48 = arith.constant 2 : index
    %c0_49 = arith.constant 0 : index
    %c0_50 = arith.constant 0 : index
    %81 = vector.load %arg2[%c2_48, %c0_49, %c0_50] : memref<4x128x256xf32, #tpu.memory_space<vmem>>, vector<1x128x256xf32>
    %82 = vector.shape_cast %81 : vector<1x128x256xf32> to vector<128x256xf32>
    %83 = vector.broadcast %80 : vector<128x1xf32> to vector<128x256xf32>
    %84 = arith.mulf %82, %83 : vector<128x256xf32>
    %c2_51 = arith.constant 2 : index
    %c0_52 = arith.constant 0 : index
    %c0_53 = arith.constant 0 : index
    %85 = vector.load %arg3[%c2_51, %c0_52, %c0_53] : memref<4x128x256xf32, #tpu.memory_space<vmem>>, vector<1x128x256xf32>
    %86 = vector.shape_cast %85 : vector<1x128x256xf32> to vector<128x256xf32>
    %87 = vector.shape_cast %84 : vector<128x256xf32> to vector<1x128x256xf32>
    tpu.vector_store %arg3[%c2_51, %c0_52, %c0_53], %87 {strides = array<i32>} : memref<4x128x256xf32, #tpu.memory_space<vmem>>, vector<1x128x256xf32>,
    %c3 = arith.constant 3 : index
    %c0_54 = arith.constant 0 : index
    %c0_55 = arith.constant 0 : index
    %88 = vector.load %arg2[%c3, %c0_54, %c0_55] : memref<4x128x256xf32, #tpu.memory_space<vmem>>, vector<1x128x256xf32>
    %89 = vector.shape_cast %88 : vector<1x128x256xf32> to vector<128x256xf32>
    %cst_56 = arith.constant dense<0.000000e+00> : vector<128xf32>
    %90 = vector.multi_reduction <add>, %89, %cst_56 [1] : vector<128x256xf32> to vector<128xf32>
    %91 = vector.shape_cast %90 : vector<128xf32> to vector<128x1xf32>
    %cst_57 = arith.constant 3.906250e-03 : f32
    %92 = vector.broadcast %cst_57 : f32 to vector<128x1xf32>
    %93 = arith.mulf %91, %92 : vector<128x1xf32>
    %c0_58 = arith.constant 0 : index
    %c0_59 = arith.constant 0 : index
    %94 = vector.load %arg4[%c0_58, %c0_59] : memref<128x128xf32, #tpu.memory_space<vmem>>, vector<128x128xf32>
    %cst_60 = arith.constant dense<0.000000e+00> : vector<128x1xf32>
    %95 = tpu.matmul %94, %93, %cst_60 {dimension_numbers = #tpu.dot_dimension_numbers<[1], [0], [0], [1], [0, 0, 1, 1], [], []>} : vector<128x128xf32>, vector<128x1xf32>, vector<128x1xf32> -> vector<128x1xf32>
    %cst_61 = arith.constant 0.000000e+00 : f32
    %96 = vector.broadcast %cst_61 : f32 to vector<128x1xf32>
    %97 = arith.subf %96, %95 : vector<128x1xf32>
    %98 = math.exp %97 : vector<128x1xf32>
    %cst_62 = arith.constant 1.000000e+00 : f32
    %99 = vector.broadcast %cst_62 : f32 to vector<128x1xf32>
    %100 = arith.addf %99, %98 : vector<128x1xf32>
    %cst_63 = arith.constant 1.000000e+00 : f32
    %101 = vector.broadcast %cst_63 : f32 to vector<128x1xf32>
    %102 = arith.divf %101, %100 : vector<128x1xf32>
    %c3_64 = arith.constant 3 : index
    %c0_65 = arith.constant 0 : index
    %c0_66 = arith.constant 0 : index
    %103 = vector.load %arg2[%c3_64, %c0_65, %c0_66] : memref<4x128x256xf32, #tpu.memory_space<vmem>>, vector<1x128x256xf32>
    %104 = vector.shape_cast %103 : vector<1x128x256xf32> to vector<128x256xf32>
    %105 = vector.broadcast %102 : vector<128x1xf32> to vector<128x256xf32>
    %106 = arith.mulf %104, %105 : vector<128x256xf32>
    %c3_67 = arith.constant 3 : index
    %c0_68 = arith.constant 0 : index
    %c0_69 = arith.constant 0 : index
    %107 = vector.load %arg3[%c3_67, %c0_68, %c0_69] : memref<4x128x256xf32, #tpu.memory_space<vmem>>, vector<1x128x256xf32>
    %108 = vector.shape_cast %107 : vector<1x128x256xf32> to vector<128x256xf32>
    %109 = vector.shape_cast %106 : vector<128x256xf32> to vector<1x128x256xf32>
    tpu.vector_store %arg3[%c3_67, %c0_68, %c0_69], %109 {strides = array<i32>} : memref<4x128x256xf32, #tpu.memory_space<vmem>>, vector<1x128x256xf32>,
    return
  }
  func.func @transform_0(%arg0: i32) -> i32 {
    %c0_i32 = arith.constant 0 : i32
    %c0_i32_0 = arith.constant 0 : i32
    return %c0_i32 : i32
  }
  func.func @transform_1(%arg0: i32) -> (i32, i32, i32) {
    %c0_i32 = arith.constant 0 : i32
    %c0_i32_0 = arith.constant 0 : i32
    %c0_i32_1 = arith.constant 0 : i32
    return %arg0, %c0_i32, %c0_i32_0 : i32, i32, i32
  }
  func.func @transform_2(%arg0: i32) -> (i32, i32, i32) {
    %c0_i32 = arith.constant 0 : i32
    %c0_i32_0 = arith.constant 0 : i32
    %c0_i32_1 = arith.constant 0 : i32
    return %arg0, %c0_i32, %c0_i32_0 : i32, i32, i32
  }
}

</mosaic_0001>

<llo_original>
// kernel: tpu_custom_call.1
$region0: #{tpu_custom_call.1}
  #allocation0 [shape = 'u32[]', space=smem, size = 0x4, offset = 0x4, fixed_abs, tag = 'smem constant byte address 0x4 - core index']
  #allocation1 [shape = 'u32[144,128]{1,0:T(1,128)}', space=vmem, size = 0x12000, scoped, tag = 'internal scratch']
  #allocation2 [shape = 'f32[128,128]{1,0:T(8,128)}', space=vmem, size = 0x10000, scoped, tag = 'scratch operand']
  %s0 = inlined_call_operand.hbm [shape: f32[3], index: 0, kind: input, shape index: {}]
  %s1 = inlined_call_operand.hbm [shape: f32[8,128,256], index: 1, kind: input, shape index: {}]
  %s2 = inlined_call_operand.hbm [shape: f32[8,128,256], index: 2, kind: output, shape index: {}]
  %s3 = sld [smem:[#allocation0]]
  $region49: #{tpu_custom_call.1} parent=0
    _
  %s5 = ssub.s32 1, %s3
  %s6 = scalar_select 0, %s5, %s3
  $region1: #{tpu_custom_call.1} parent=0
    #allocation3 [shape = 'u8[512]{0}', space=smem, size = 0x200, scoped, tag = 'input window, operand 0, single buffered']
    #allocation4 [shape = 's32[2]{0}', space=sflag, size = 0x8, scoped, tag = 'scoped memory for tpu_custom_call.1']
    #allocation5 [shape = 's32[2]{0}', space=sflag, size = 0x8, scoped, tag = 'scoped memory for tpu_custom_call.1']
    #allocation6 [shape = 's32[2]{0}', space=sflag, size = 0x8, scoped, tag = 'scoped memory for tpu_custom_call.1']
    #allocation7 [shape = 'u8[1048576]{0}', space=vmem, size = 0x100000, scoped, tag = 'input window, operand 1']
    #allocation8 [shape = 'u8[1048576]{0}', space=vmem, size = 0x100000, scoped, tag = 'output window, operand 0']
    %7 = vsyncpa [#allocation6], 0
    %8 = vsyncpa [#allocation4], 0
    %s9 = scalar_lea.sflag [#allocation4], 1
    %10 = vsyncpa %s9, 0
    %11 = vsyncpa [#allocation5], 0
    %s12 = scalar_lea.sflag [#allocation5], 1
    %13 = vsyncpa %s12, 0
    loop: start=0, step=1, limit=4
    $region2: #{tpu_custom_call.1} parent=1 // loop_pre_header
      _
    $region3: #{tpu_custom_call.1} parent=1 // loop_header
      %s15 = sphi 0, %s19
      %p16 = scmp.ge.s32.totalorder %s15, 4
      %s23 = sphi 0, %s23
      %s25 = sphi 0, %s23
      %s26 = sphi 0, %s25
      %s40 = sphi 0, %s26
      %s46 = sphi 0, %s48
      %s49 = sphi 0, %s46
      %s50 = sphi 0, %s49
      %s66 = sphi 0, %s50
      %s72 = sphi 0, %s74
      %s75 = sphi 0, %s72
      %s76 = sphi 0, %s75
      %s92 = sphi 0, %s76
    $region4: #{tpu_custom_call.1} parent=1 // loop_header_branch
      %18 = sbr.rel (%p16) target = $region8
    $region5: #{tpu_custom_call.1} parent=1 // loop_body
      %s20 = ssub.s32 %s15, 1
      %s21 = ssub.s32 %s15, 2
      %s22 = sadd.s32 %s15, 1
      %s24 = sadd.s32 %s23, 1
      %p27 = scmp.eq.s32.totalorder %s15, 1
      %p28 = scmp.ne.s32.totalorder %s23, %s25
      %p29 = scmp.eq.s32.totalorder %s15, 0
      %p30 = por %p28, %p29
      %p31 = scmp.ne.s32.totalorder %s23, %s25
      %p32 = scmp.eq.s32.totalorder %s20, 1
      %p33 = por %p31, %p32
      %p34 = scmp.ne.s32.totalorder %s25, %s26
      %p35 = scmp.eq.s32.totalorder %s20, 0
      %p36 = por %p34, %p35
      %p37 = scmp.ne.s32.totalorder %s25, %s26
      %p38 = scmp.eq.s32.totalorder %s21, 1
      %p39 = por %p37, %p38
      %p41 = scmp.ne.s32.totalorder %s26, %s40
      %p42 = scmp.eq.s32.totalorder %s21, 0
      %p43 = por %p41, %p42
      %s44 = ssub.s32 %s15, %s22
      %p45 = scmp.eq.s32.totalorder %s44, 0
      %s47 = sadd.s32 %s46, 1
      %s48 = scalar_select %p45, %s46, %s47
      %p51 = pneg %p45
      %p52 = scmp.eq.s32.totalorder %s15, 1
      %p53 = por %p51, %p52
      %p54 = scmp.ne.s32.totalorder %s46, %s49
      %p55 = scmp.eq.s32.totalorder %s15, 0
      %p56 = por %p54, %p55
      %p57 = scmp.ne.s32.totalorder %s46, %s49
      %p58 = scmp.eq.s32.totalorder %s20, 1
      %p59 = por %p57, %p58
      %p60 = scmp.ne.s32.totalorder %s49, %s50
      %p61 = scmp.eq.s32.totalorder %s20, 0
      %p62 = por %p60, %p61
      %p63 = scmp.ne.s32.totalorder %s49, %s50
      %p64 = scmp.eq.s32.totalorder %s21, 1
      %p65 = por %p63, %p64
      %p67 = scmp.ne.s32.totalorder %s50, %s66
      %p68 = scmp.eq.s32.totalorder %s21, 0
      %p69 = por %p67, %p68
      %s70 = ssub.s32 %s15, %s22
      %p71 = scmp.eq.s32.totalorder %s70, 0
      %s73 = sadd.s32 %s72, 1
      %s74 = scalar_select %p71, %s72, %s73
      %p77 = pneg %p71
      %p78 = scmp.eq.s32.totalorder %s15, 1
      %p79 = por %p77, %p78
      %p80 = scmp.ne.s32.totalorder %s72, %s75
      %p81 = scmp.eq.s32.totalorder %s15, 0
      %p82 = por %p80, %p81
      %p83 = scmp.ne.s32.totalorder %s72, %s75
      %p84 = scmp.eq.s32.totalorder %s20, 1
      %p85 = por %p83, %p84
      %p86 = scmp.ne.s32.totalorder %s75, %s76
      %p87 = scmp.eq.s32.totalorder %s20, 0
      %p88 = por %p86, %p87
      %p89 = scmp.ne.s32.totalorder %s75, %s76
      %p90 = scmp.eq.s32.totalorder %s21, 1
      %p91 = por %p89, %p90
      %p93 = scmp.ne.s32.totalorder %s76, %s92
      %p94 = scmp.eq.s32.totalorder %s21, 0
      %p95 = por %p93, %p94
      %p96 = scmp.le.s32.totalorder 1, %s15
      %p97 = scmp.lt.s32.totalorder %s15, 3
      %p98 = pnand %p96, %p97
      %p99 = pneg %p98
      // Predicated region
      $region9: #{tpu_custom_call.1} parent=5 // pred_check
        _
      $region10: #{tpu_custom_call.1} parent=5 // pred_check_branch
        %101 = sbr.rel (%p98) target = $region12
      $region11: #{tpu_custom_call.1} parent=5 // pred_region
        %s102 = ssub.s32 %s15, 1
        // Predicated region
        $region13: #{tpu_custom_call.1} parent=11 // pred_check
          %p103 = pneg %p36
        $region14: #{tpu_custom_call.1} parent=11 // pred_check_branch
          %105 = sbr.rel (%p103) target = $region16
        $region15: #{tpu_custom_call.1} parent=11 // pred_region
          %s107 = ssub.s32 16, 16
          %108 = vsyncadd [#allocation6], %s107
          %111 = dma.hbm_to_smem %s0, 16, [#allocation3], [#allocation6]
        $region16: #{tpu_custom_call.1} parent=11 // pred_fallthru
          _
      $region12: #{tpu_custom_call.1} parent=5 // pred_fallthru
        _
      %p112 = scmp.lt.s32.totalorder %s15, 2
      // Predicated region
      $region17: #{tpu_custom_call.1} parent=5 // pred_check
        %p113 = pneg %p112
      $region18: #{tpu_custom_call.1} parent=5 // pred_check_branch
        %115 = sbr.rel (%p113) target = $region20
      $region19: #{tpu_custom_call.1} parent=5 // pred_region
        // Predicated region
        $region21: #{tpu_custom_call.1} parent=19 // pred_check
          %p116 = pneg %p56
        $region22: #{tpu_custom_call.1} parent=19 // pred_check_branch
          %118 = sbr.rel (%p116) target = $region24
        $region23: #{tpu_custom_call.1} parent=19 // pred_region
          %s119 = sand.u32 %s46, 1
          %s120 = scalar_lea.sflag [#allocation4], %s119
          %s121 = sand.u32 %s46, 1
          %s122 = smul.addr %s121, 1024
          %s123 = scalar_lea.vmem [#allocation7], %s122
          %s124 = smul.u32 4, %s15
          %s126 = ssub.s32 16384, 16384
          %127 = vsyncadd %s120, %s126
          %s128 = smul.addr %s124, 32
          %s129 = smul.addr %s128, 128
          %s130 = scalar_lea.hbm %s1, %s129
          %s131 = sshll.u32 %s123, 4
          %s132 = int_to_ptr.vmem [resolvable:$true] %s131
          %137 = dma.hbm_to_vmem [thread:$0]  %s130, 16384, %s132, %s120, 256, 256, 16
        $region24: #{tpu_custom_call.1} parent=19 // pred_fallthru
          _
      $region20: #{tpu_custom_call.1} parent=5 // pred_fallthru
        _
      %p138 = scmp.le.s32.totalorder 1, %s15
      %p139 = scmp.lt.s32.totalorder %s15, 3
      %p140 = pnand %p138, %p139
      %p141 = pneg %p140
      // Predicated region
      $region25: #{tpu_custom_call.1} parent=5 // pred_check
        _
      $region26: #{tpu_custom_call.1} parent=5 // pred_check_branch
        %143 = sbr.rel (%p140) target = $region28
      $region27: #{tpu_custom_call.1} parent=5 // pred_region
        %s144 = ssub.s32 %s15, 1
        // Predicated region
        $region29: #{tpu_custom_call.1} parent=27 // pred_check
          %p145 = pneg %p36
        $region30: #{tpu_custom_call.1} parent=27 // pred_check_branch
          %147 = sbr.rel (%p145) target = $region32
        $region31: #{tpu_custom_call.1} parent=27 // pred_region
          %148 = dma.done [#allocation6], 16
        $region32: #{tpu_custom_call.1} parent=27 // pred_fallthru
          _
        %s149 = sand.u32 %s49, 1
        %s150 = scalar_lea.sflag [#allocation4], %s149
        %s151 = sand.u32 %s49, 1
        %s152 = smul.addr %s151, 1024
        %s153 = scalar_lea.vmem [#allocation7], %s152
        // Predicated region
        $region33: #{tpu_custom_call.1} parent=27 // pred_check
          %p154 = pneg %p62
        $region34: #{tpu_custom_call.1} parent=27 // pred_check_branch
          %156 = sbr.rel (%p154) target = $region36
        $region35: #{tpu_custom_call.1} parent=27 // pred_region
          %157 = dma.done %s150, 16384
        $region36: #{tpu_custom_call.1} parent=27 // pred_fallthru
          _
        %158 = sfence
        %p159 = pneg %p36
        %p160 = pneg %p33
        %s161 = sand.u32 %s49, 1
        %s162 = scalar_lea.sflag [#allocation4], %s161
        %s163 = sand.u32 %s49, 1
        %s164 = smul.addr %s163, 1024
        %s165 = scalar_lea.vmem [#allocation7], %s164
        %p166 = pneg %p62
        %p167 = pneg %p59
        %p168 = pneg %p88
        %p169 = pneg %p85
        %s170 = sand.u32 %s75, 1
        %s171 = scalar_lea.sflag [#allocation5], %s170
        %s172 = sand.u32 %s75, 1
        %s173 = smul.addr %s172, 1024
        %s174 = scalar_lea.vmem [#allocation8], %s173
        %s175 = smul.u32 4, %s20
        %s176 = smul.u32 4, %s20
        %v177 = vlaneseq
        %v178 = vshrl.u32 %v177, 7
        %v179 = vadd.s32 %v178, 8
        %v180 = vadd.s32 %v178, 16
        %v181 = vadd.s32 %v178, 24
        %v182 = vadd.s32 %v178, 32
        %v183 = vadd.s32 %v178, 40
        %v184 = vadd.s32 %v178, 48
        %v185 = vadd.s32 %v178, 56
        %v186 = vadd.s32 %v178, 64
        %v187 = vadd.s32 %v178, 72
        %v188 = vadd.s32 %v178, 80
        %v189 = vadd.s32 %v178, 88
        %v190 = vadd.s32 %v178, 96
        %v191 = vadd.s32 %v178, 104
        %v192 = vadd.s32 %v178, 112
        %v193 = vadd.s32 %v178, 120
        %v194 = vlaneseq
        %v195 = vand.u32 %v194, 127
        %v196 = vsub.s32 %v195, %v178
        %v197 = vsub.s32 %v195, %v179
        %v198 = vsub.s32 %v195, %v180
        %v199 = vsub.s32 %v195, %v181
        %v200 = vsub.s32 %v195, %v182
        %v201 = vsub.s32 %v195, %v183
        %v202 = vsub.s32 %v195, %v184
        %v203 = vsub.s32 %v195, %v185
        %v204 = vsub.s32 %v195, %v186
        %v205 = vsub.s32 %v195, %v187
        %v206 = vsub.s32 %v195, %v188
        %v207 = vsub.s32 %v195, %v189
        %v208 = vsub.s32 %v195, %v190
        %v209 = vsub.s32 %v195, %v191
        %v210 = vsub.s32 %v195, %v192
        %v211 = vsub.s32 %v195, %v193
        %v212 = vadd.s32 %v196, 1
        %v213 = vadd.s32 %v197, 1
        %v214 = vadd.s32 %v198, 1
        %v215 = vadd.s32 %v199, 1
        %v216 = vadd.s32 %v200, 1
        %v217 = vadd.s32 %v201, 1
        %v218 = vadd.s32 %v202, 1
        %v219 = vadd.s32 %v203, 1
        %v220 = vadd.s32 %v204, 1
        %v221 = vadd.s32 %v205, 1
        %v222 = vadd.s32 %v206, 1
        %v223 = vadd.s32 %v207, 1
        %v224 = vadd.s32 %v208, 1
        %v225 = vadd.s32 %v209, 1
        %v226 = vadd.s32 %v210, 1
        %v227 = vadd.s32 %v211, 1
        %vm228 = vcmp.eq.s32.totalorder %v212, 0
        %vm229 = vcmp.eq.s32.totalorder %v213, 0
        %vm230 = vcmp.eq.s32.totalorder %v214, 0
        %vm231 = vcmp.eq.s32.totalorder %v215, 0
        %vm232 = vcmp.eq.s32.totalorder %v216, 0
        %vm233 = vcmp.eq.s32.totalorder %v217, 0
        %vm234 = vcmp.eq.s32.totalorder %v218, 0
        %vm235 = vcmp.eq.s32.totalorder %v219, 0
        %vm236 = vcmp.eq.s32.totalorder %v220, 0
        %vm237 = vcmp.eq.s32.totalorder %v221, 0
        %vm238 = vcmp.eq.s32.totalorder %v222, 0
        %vm239 = vcmp.eq.s32.totalorder %v223, 0
        %vm240 = vcmp.eq.s32.totalorder %v224, 0
        %vm241 = vcmp.eq.s32.totalorder %v225, 0
        %vm242 = vcmp.eq.s32.totalorder %v226, 0
        %vm243 = vcmp.eq.s32.totalorder %v227, 0
        %s244 = sld [smem:[#allocation3]]
        %v245 = vstv %s244
        %v246 = vsel %vm228, %v245, 0.0
        %v247 = vsel %vm229, %v245, 0.0
        %v248 = vsel %vm230, %v245, 0.0
        %v249 = vsel %vm231, %v245, 0.0
        %v250 = vsel %vm232, %v245, 0.0
        %v251 = vsel %vm233, %v245, 0.0
        %v252 = vsel %vm234, %v245, 0.0
        %v253 = vsel %vm235, %v245, 0.0
        %v254 = vsel %vm236, %v245, 0.0
        %v255 = vsel %vm237, %v245, 0.0
        %v256 = vsel %vm238, %v245, 0.0
        %v257 = vsel %vm239, %v245, 0.0
        %v258 = vsel %vm240, %v245, 0.0
        %v259 = vsel %vm241, %v245, 0.0
        %v260 = vsel %vm242, %v245, 0.0
        %v261 = vsel %vm243, %v245, 0.0
        %vm262 = vcmp.eq.s32.totalorder %v212, 1
        %vm263 = vcmp.eq.s32.totalorder %v213, 1
        %vm264 = vcmp.eq.s32.totalorder %v214, 1
        %vm265 = vcmp.eq.s32.totalorder %v215, 1
        %vm266 = vcmp.eq.s32.totalorder %v216, 1
        %vm267 = vcmp.eq.s32.totalorder %v217, 1
        %vm268 = vcmp.eq.s32.totalorder %v218, 1
        %vm269 = vcmp.eq.s32.totalorder %v219, 1
        %vm270 = vcmp.eq.s32.totalorder %v220, 1
        %vm271 = vcmp.eq.s32.totalorder %v221, 1
        %vm272 = vcmp.eq.s32.totalorder %v222, 1
        %vm273 = vcmp.eq.s32.totalorder %v223, 1
        %vm274 = vcmp.eq.s32.totalorder %v224, 1
        %vm275 = vcmp.eq.s32.totalorder %v225, 1
        %vm276 = vcmp.eq.s32.totalorder %v226, 1
        %vm277 = vcmp.eq.s32.totalorder %v227, 1
        %s278 = sld [smem:[#allocation3 + $0x1]]
        %v279 = vstv %s278
        %v280 = vsel %vm262, %v279, %v246
        %v281 = vsel %vm263, %v279, %v247
        %v282 = vsel %vm264, %v279, %v248
        %v283 = vsel %vm265, %v279, %v249
        %v284 = vsel %vm266, %v279, %v250
        %v285 = vsel %vm267, %v279, %v251
        %v286 = vsel %vm268, %v279, %v252
        %v287 = vsel %vm269, %v279, %v253
        %v288 = vsel %vm270, %v279, %v254
        %v289 = vsel %vm271, %v279, %v255
        %v290 = vsel %vm272, %v279, %v256
        %v291 = vsel %vm273, %v279, %v257
        %v292 = vsel %vm274, %v279, %v258
        %v293 = vsel %vm275, %v279, %v259
        %v294 = vsel %vm276, %v279, %v260
        %v295 = vsel %vm277, %v279, %v261
        %vm296 = vcmp.eq.s32.totalorder %v212, 2
        %vm297 = vcmp.eq.s32.totalorder %v213, 2
        %vm298 = vcmp.eq.s32.totalorder %v214, 2
        %vm299 = vcmp.eq.s32.totalorder %v215, 2
        %vm300 = vcmp.eq.s32.totalorder %v216, 2
        %vm301 = vcmp.eq.s32.totalorder %v217, 2
        %vm302 = vcmp.eq.s32.totalorder %v218, 2
        %vm303 = vcmp.eq.s32.totalorder %v219, 2
        %vm304 = vcmp.eq.s32.totalorder %v220, 2
        %vm305 = vcmp.eq.s32.totalorder %v221, 2
        %vm306 = vcmp.eq.s32.totalorder %v222, 2
        %vm307 = vcmp.eq.s32.totalorder %v223, 2
        %vm308 = vcmp.eq.s32.totalorder %v224, 2
        %vm309 = vcmp.eq.s32.totalorder %v225, 2
        %vm310 = vcmp.eq.s32.totalorder %v226, 2
        %vm311 = vcmp.eq.s32.totalorder %v227, 2
        %s312 = sld [smem:[#allocation3 + $0x2]]
        %v313 = vstv %s312
        %v314 = vsel %vm296, %v313, %v280
        %v315 = vsel %vm297, %v313, %v281
        %v316 = vsel %vm298, %v313, %v282
        %v317 = vsel %vm299, %v313, %v283
        %v318 = vsel %vm300, %v313, %v284
        %v319 = vsel %vm301, %v313, %v285
        %v320 = vsel %vm302, %v313, %v286
        %v321 = vsel %vm303, %v313, %v287
        %v322 = vsel %vm304, %v313, %v288
        %v323 = vsel %vm305, %v313, %v289
        %v324 = vsel %vm306, %v313, %v290
        %v325 = vsel %vm307, %v313, %v291
        %v326 = vsel %vm308, %v313, %v292
        %v327 = vsel %vm309, %v313, %v293
        %v328 = vsel %vm310, %v313, %v294
        %v329 = vsel %vm311, %v313, %v295
        %330 = vst [vmem:[#allocation2] sm:$0xff] %v314
        %331 = vst [vmem:[#allocation2 + $0x8] sm:$0xff] %v315
        %332 = vst [vmem:[#allocation2 + $0x10] sm:$0xff] %v316
        %333 = vst [vmem:[#allocation2 + $0x18] sm:$0xff] %v317
        %334 = vst [vmem:[#allocation2 + $0x20] sm:$0xff] %v318
        %335 = vst [vmem:[#allocation2 + $0x28] sm:$0xff] %v319
        %336 = vst [vmem:[#allocation2 + $0x30] sm:$0xff] %v320
        %337 = vst [vmem:[#allocation2 + $0x38] sm:$0xff] %v321
        %338 = vst [vmem:[#allocation2 + $0x40] sm:$0xff] %v322
        %339 = vst [vmem:[#allocation2 + $0x48] sm:$0xff] %v323
        %340 = vst [vmem:[#allocation2 + $0x50] sm:$0xff] %v324
        %341 = vst [vmem:[#allocation2 + $0x58] sm:$0xff] %v325
        %342 = vst [vmem:[#allocation2 + $0x60] sm:$0xff] %v326
        %343 = vst [vmem:[#allocation2 + $0x68] sm:$0xff] %v327
        %344 = vst [vmem:[#allocation2 + $0x70] sm:$0xff] %v328
        %345 = vst [vmem:[#allocation2 + $0x78] sm:$0xff] %v329
        %v346 = vld [vmem:[%s153] sm:$0xff]
        %v347 = vld [vmem:[%s153 + $0x8] sm:$0xff]
        %v348 = vld [vmem:[%s153 + $0x10] sm:$0xff]
        %v349 = vld [vmem:[%s153 + $0x18] sm:$0xff]
        %v350 = vld [vmem:[%s153 + $0x20] sm:$0xff]
        %v351 = vld [vmem:[%s153 + $0x28] sm:$0xff]
        %v352 = vld [vmem:[%s153 + $0x30] sm:$0xff]
        %v353 = vld [vmem:[%s153 + $0x38] sm:$0xff]
        %v354 = vld [vmem:[%s153 + $0x40] sm:$0xff]
        %v355 = vld [vmem:[%s153 + $0x48] sm:$0xff]
        %v356 = vld [vmem:[%s153 + $0x50] sm:$0xff]
        %v357 = vld [vmem:[%s153 + $0x58] sm:$0xff]
        %v358 = vld [vmem:[%s153 + $0x60] sm:$0xff]
        %v359 = vld [vmem:[%s153 + $0x68] sm:$0xff]
        %v360 = vld [vmem:[%s153 + $0x70] sm:$0xff]
        %v361 = vld [vmem:[%s153 + $0x78] sm:$0xff]
        %v362 = vld [vmem:[%s153 + $0x80] sm:$0xff]
        %v363 = vld [vmem:[%s153 + $0x88] sm:$0xff]
        %v364 = vld [vmem:[%s153 + $0x90] sm:$0xff]
        %v365 = vld [vmem:[%s153 + $0x98] sm:$0xff]
        %v366 = vld [vmem:[%s153 + $0xa0] sm:$0xff]
        %v367 = vld [vmem:[%s153 + $0xa8] sm:$0xff]
        %v368 = vld [vmem:[%s153 + $0xb0] sm:$0xff]
        %v369 = vld [vmem:[%s153 + $0xb8] sm:$0xff]
        %v370 = vld [vmem:[%s153 + $0xc0] sm:$0xff]
        %v371 = vld [vmem:[%s153 + $0xc8] sm:$0xff]
        %v372 = vld [vmem:[%s153 + $0xd0] sm:$0xff]
        %v373 = vld [vmem:[%s153 + $0xd8] sm:$0xff]
        %v374 = vld [vmem:[%s153 + $0xe0] sm:$0xff]
        %v375 = vld [vmem:[%s153 + $0xe8] sm:$0xff]
        %v376 = vld [vmem:[%s153 + $0xf0] sm:$0xff]
        %v377 = vld [vmem:[%s153 + $0xf8] sm:$0xff]
        %v378 = vadd.f32 %v346, %v347
        %379 = vadd.xlane.f32.xlu0 %v378
        %v380 = vpop.xlane.xlu0 %379
        %v381 = vadd.f32 %v348, %v349
        %382 = vadd.xlane.f32.xlu0 %v381
        %v383 = vpop.xlane.xlu0 %382
        %v384 = vadd.f32 %v350, %v351
        %385 = vadd.xlane.f32.xlu0 %v384
        %v386 = vpop.xlane.xlu0 %385
        %v387 = vadd.f32 %v352, %v353
        %388 = vadd.xlane.f32.xlu0 %v387
        %v389 = vpop.xlane.xlu0 %388
        %v390 = vadd.f32 %v354, %v355
        %391 = vadd.xlane.f32.xlu0 %v390
        %v392 = vpop.xlane.xlu0 %391
        %v393 = vadd.f32 %v356, %v357
        %394 = vadd.xlane.f32.xlu0 %v393
        %v395 = vpop.xlane.xlu0 %394
        %v396 = vadd.f32 %v358, %v359
        %397 = vadd.xlane.f32.xlu0 %v396
        %v398 = vpop.xlane.xlu0 %397
        %v399 = vadd.f32 %v360, %v361
        %400 = vadd.xlane.f32.xlu0 %v399
        %v401 = vpop.xlane.xlu0 %400
        %v402 = vadd.f32 %v362, %v363
        %403 = vadd.xlane.f32.xlu0 %v402
        %v404 = vpop.xlane.xlu0 %403
        %v405 = vadd.f32 %v364, %v365
        %406 = vadd.xlane.f32.xlu0 %v405
        %v407 = vpop.xlane.xlu0 %406
        %v408 = vadd.f32 %v366, %v367
        %409 = vadd.xlane.f32.xlu0 %v408
        %v410 = vpop.xlane.xlu0 %409
        %v411 = vadd.f32 %v368, %v369
        %412 = vadd.xlane.f32.xlu0 %v411
        %v413 = vpop.xlane.xlu0 %412
        %v414 = vadd.f32 %v370, %v371
        %415 = vadd.xlane.f32.xlu0 %v414
        %v416 = vpop.xlane.xlu0 %415
        %v417 = vadd.f32 %v372, %v373
        %418 = vadd.xlane.f32.xlu0 %v417
        %v419 = vpop.xlane.xlu0 %418
        %v420 = vadd.f32 %v374, %v375
        %421 = vadd.xlane.f32.xlu0 %v420
        %v422 = vpop.xlane.xlu0 %421
        %v423 = vadd.f32 %v376, %v377
        %424 = vadd.xlane.f32.xlu0 %v423
        %v425 = vpop.xlane.xlu0 %424
        %v426 = vmul.f32 %v380, 0.00390625
        %v427 = vmul.f32 %v383, 0.00390625
        %v428 = vmul.f32 %v386, 0.00390625
        %v429 = vmul.f32 %v389, 0.00390625
        %v430 = vmul.f32 %v392, 0.00390625
        %v431 = vmul.f32 %v395, 0.00390625
        %v432 = vmul.f32 %v398, 0.00390625
        %v433 = vmul.f32 %v401, 0.00390625
        %v434 = vmul.f32 %v404, 0.00390625
        %v435 = vmul.f32 %v407, 0.00390625
        %v436 = vmul.f32 %v410, 0.00390625
        %v437 = vmul.f32 %v413, 0.00390625
        %v438 = vmul.f32 %v416, 0.00390625
        %v439 = vmul.f32 %v419, 0.00390625
        %v440 = vmul.f32 %v422, 0.00390625
        %v441 = vmul.f32 %v425, 0.00390625
        %v442 = vld [vmem:[#allocation2] sm:$0xff]
        %v443 = vld [vmem:[#allocation2 + $0x8] sm:$0xff]
        %v444 = vld [vmem:[#allocation2 + $0x10] sm:$0xff]
        %v445 = vld [vmem:[#allocation2 + $0x18] sm:$0xff]
        %v446 = vld [vmem:[#allocation2 + $0x20] sm:$0xff]
        %v447 = vld [vmem:[#allocation2 + $0x28] sm:$0xff]
        %v448 = vld [vmem:[#allocation2 + $0x30] sm:$0xff]
        %v449 = vld [vmem:[#allocation2 + $0x38] sm:$0xff]
        %v450 = vld [vmem:[#allocation2 + $0x40] sm:$0xff]
        %v451 = vld [vmem:[#allocation2 + $0x48] sm:$0xff]
        %v452 = vld [vmem:[#allocation2 + $0x50] sm:$0xff]
        %v453 = vld [vmem:[#allocation2 + $0x58] sm:$0xff]
        %v454 = vld [vmem:[#allocation2 + $0x60] sm:$0xff]
        %v455 = vld [vmem:[#allocation2 + $0x68] sm:$0xff]
        %v456 = vld [vmem:[#allocation2 + $0x70] sm:$0xff]
        %v457 = vld [vmem:[#allocation2 + $0x78] sm:$0xff]
        %458 = vmatprep.subr.mxu0 0.0
        %459 = vmatpush1.msra.mxu0 %v426
        %460 = vmatprep.subr.mxu0 0.0
        %461 = vmatpush1.msra.mxu0 %v427
        %462 = vmatprep.subr.mxu0 0.0
        %463 = vmatpush1.msra.mxu0 %v428
        %464 = vmatprep.subr.mxu0 0.0
        %465 = vmatpush1.msra.mxu0 %v429
        %466 = vmatprep.subr.mxu0 0.0
        %467 = vmatpush1.msra.mxu0 %v430
        %468 = vmatprep.subr.mxu0 0.0
        %469 = vmatpush1.msra.mxu0 %v431
        %470 = vmatprep.subr.mxu0 0.0
        %471 = vmatpush1.msra.mxu0 %v432
        %472 = vmatprep.subr.mxu0 0.0
        %473 = vmatpush1.msra.mxu0 %v433
        %474 = vmatprep.subr.mxu0 0.0
        %475 = vmatpush1.msra.mxu0 %v434
        %476 = vmatprep.subr.mxu0 0.0
        %477 = vmatpush1.msra.mxu0 %v435
        %478 = vmatprep.subr.mxu0 0.0
        %479 = vmatpush1.msra.mxu0 %v436
        %480 = vmatprep.subr.mxu0 0.0
        %481 = vmatpush1.msra.mxu0 %v437
        %482 = vmatprep.subr.mxu0 0.0
        %483 = vmatpush1.msra.mxu0 %v438
        %484 = vmatprep.subr.mxu0 0.0
        %485 = vmatpush1.msra.mxu0 %v439
        %486 = vmatprep.subr.mxu0 0.0
        %487 = vmatpush1.msra.mxu0 %v440
        %488 = vmatprep.subr.mxu0 0.0
        %489 = vmatpush1.msra.mxu0 %v441
        %490 = vmatprep.subr.mxu0 0.0
        %491 = vmatpush1.msra.mxu0 0.0
        %492 = vmatprep.subr.mxu0 0.0
        %493 = vmatpush1.msra.mxu0 0.0
        %494 = vmatprep.subr.mxu0 0.0
        %495 = vmatpush1.msra.mxu0 0.0
        %496 = vmatprep.subr.mxu0 0.0
        %497 = vmatpush1.msra.mxu0 0.0
        %498 = vmatprep.subr.mxu0 0.0
        %499 = vmatpush1.msra.mxu0 0.0
        %500 = vmatprep.subr.mxu0 0.0
        %501 = vmatpush1.msra.mxu0 0.0
        %502 = vmatprep.subr.mxu0 0.0
        %503 = vmatpush1.msra.mxu0 0.0
        %504 = vmatprep.subr.mxu0 0.0
        %505 = vmatpush1.msra.mxu0 0.0
        %506 = vmatprep.subr.mxu0 0.0
        %507 = vmatpush1.msra.mxu0 0.0
        %508 = vmatprep.subr.mxu0 0.0
        %509 = vmatpush1.msra.mxu0 0.0
        %510 = vmatprep.subr.mxu0 0.0
        %511 = vmatpush1.msra.mxu0 0.0
        %512 = vmatprep.subr.mxu0 0.0
        %513 = vmatpush1.msra.mxu0 0.0
        %514 = vmatprep.subr.mxu0 0.0
        %515 = vmatpush1.msra.mxu0 0.0
        %516 = vmatprep.subr.mxu0 0.0
        %517 = vmatpush1.msra.mxu0 0.0
        %518 = vmatprep.subr.mxu0 0.0
        %519 = vmatpush1.msra.mxu0 0.0
        %520 = vmatprep.subr.mxu0 0.0
        %521 = vmatpush1.msra.mxu0 0.0
        %522 = vmatprep.mubr.f32.mxu0 0.0
        %523 = vmatmul.mubr.f32.gmra.mrb[0].mxu0 %v442
        %v524 = vpop.f32.mrb[0].mxu0
        %v525 = vadd.f32 0.0, %v524
        %v526 = vpop.f32.mrb[0].mxu0
        %527 = vmatprep.mubr.f32.mxu0 0.0
        %528 = vmatmul.mubr.f32.gmra.mrb[0].mxu0 %v443
        %v529 = vpop.f32.mrb[0].mxu0
        %v530 = vadd.f32 0.0, %v529
        %v531 = vpop.f32.mrb[0].mxu0
        %532 = vmatprep.mubr.f32.mxu0 0.0
        %533 = vmatmul.mubr.f32.gmra.mrb[0].mxu0 %v444
        %v534 = vpop.f32.mrb[0].mxu0
        %v535 = vadd.f32 0.0, %v534
        %v536 = vpop.f32.mrb[0].mxu0
        %537 = vmatprep.mubr.f32.mxu0 0.0
        %538 = vmatmul.mubr.f32.gmra.mrb[0].mxu0 %v445
        %v539 = vpop.f32.mrb[0].mxu0
        %v540 = vadd.f32 0.0, %v539
        %v541 = vpop.f32.mrb[0].mxu0
        %542 = vmatprep.mubr.f32.mxu0 0.0
        %543 = vmatmul.mubr.f32.gmra.mrb[0].mxu0 %v446
        %v544 = vpop.f32.mrb[0].mxu0
        %v545 = vadd.f32 0.0, %v544
        %v546 = vpop.f32.mrb[0].mxu0
        %547 = vmatprep.mubr.f32.mxu0 0.0
        %548 = vmatmul.mubr.f32.gmra.mrb[0].mxu0 %v447
        %v549 = vpop.f32.mrb[0].mxu0
        %v550 = vadd.f32 0.0, %v549
        %v551 = vpop.f32.mrb[0].mxu0
        %552 = vmatprep.mubr.f32.mxu0 0.0
        %553 = vmatmul.mubr.f32.gmra.mrb[0].mxu0 %v448
        %v554 = vpop.f32.mrb[0].mxu0
        %v555 = vadd.f32 0.0, %v554
        %v556 = vpop.f32.mrb[0].mxu0
        %557 = vmatprep.mubr.f32.mxu0 0.0
        %558 = vmatmul.mubr.f32.gmra.mrb[0].mxu0 %v449
        %v559 = vpop.f32.mrb[0].mxu0
        %v560 = vadd.f32 0.0, %v559
        %v561 = vpop.f32.mrb[0].mxu0
        %562 = vmatprep.mubr.f32.mxu0 0.0
        %563 = vmatmul.mubr.f32.gmra.mrb[0].mxu0 %v450
        %v564 = vpop.f32.mrb[0].mxu0
        %v565 = vadd.f32 0.0, %v564
        %v566 = vpop.f32.mrb[0].mxu0
        %567 = vmatprep.mubr.f32.mxu0 0.0
        %568 = vmatmul.mubr.f32.gmra.mrb[0].mxu0 %v451
        %v569 = vpop.f32.mrb[0].mxu0
        %v570 = vadd.f32 0.0, %v569
        %v571 = vpop.f32.mrb[0].mxu0
        %572 = vmatprep.mubr.f32.mxu0 0.0
        %573 = vmatmul.mubr.f32.gmra.mrb[0].mxu0 %v452
        %v574 = vpop.f32.mrb[0].mxu0
        %v575 = vadd.f32 0.0, %v574
        %v576 = vpop.f32.mrb[0].mxu0
        %577 = vmatprep.mubr.f32.mxu0 0.0
        %578 = vmatmul.mubr.f32.gmra.mrb[0].mxu0 %v453
        %v579 = vpop.f32.mrb[0].mxu0
        %v580 = vadd.f32 0.0, %v579
        %v581 = vpop.f32.mrb[0].mxu0
        %582 = vmatprep.mubr.f32.mxu0 0.0
        %583 = vmatmul.mubr.f32.gmra.mrb[0].mxu0 %v454
        %v584 = vpop.f32.mrb[0].mxu0
        %v585 = vadd.f32 0.0, %v584
        %v586 = vpop.f32.mrb[0].mxu0
        %587 = vmatprep.mubr.f32.mxu0 0.0
        %588 = vmatmul.mubr.f32.gmra.mrb[0].mxu0 %v455
        %v589 = vpop.f32.mrb[0].mxu0
        %v590 = vadd.f32 0.0, %v589
        %v591 = vpop.f32.mrb[0].mxu0
        %592 = vmatprep.mubr.f32.mxu0 0.0
        %593 = vmatmul.mubr.f32.gmra.mrb[0].mxu0 %v456
        %v594 = vpop.f32.mrb[0].mxu0
        %v595 = vadd.f32 0.0, %v594
        %v596 = vpop.f32.mrb[0].mxu0
        %597 = vmatprep.mubr.f32.mxu0 0.0
        %598 = vmatmul.mubr.f32.gmra.mrb[0].mxu0 %v457
        %v599 = vpop.f32.mrb[0].mxu0
        %v600 = vadd.f32 0.0, %v599
        %v601 = vpop.f32.mrb[0].mxu0
        %602 = vdwg.mxu0
        %v603 = vsub.f32 0.0, %v525
        %v604 = vsub.f32 0.0, %v530
        %v605 = vsub.f32 0.0, %v535
        %v606 = vsub.f32 0.0, %v540
        %v607 = vsub.f32 0.0, %v545
        %v608 = vsub.f32 0.0, %v550
        %v609 = vsub.f32 0.0, %v555
        %v610 = vsub.f32 0.0, %v560
        %v611 = vsub.f32 0.0, %v565
        %v612 = vsub.f32 0.0, %v570
        %v613 = vsub.f32 0.0, %v575
        %v614 = vsub.f32 0.0, %v580
        %v615 = vsub.f32 0.0, %v585
        %v616 = vsub.f32 0.0, %v590
        %v617 = vsub.f32 0.0, %v595
        %v618 = vsub.f32 0.0, %v600
        %v619 = vmul.f32 %v603, 1.442695
        %v620 = vpow.pop %v619
        %v621 = vmul.f32 %v604, 1.442695
        %v622 = vpow.pop %v621
        %v623 = vmul.f32 %v605, 1.442695
        %v624 = vpow.pop %v623
        %v625 = vmul.f32 %v606, 1.442695
        %v626 = vpow.pop %v625
        %v627 = vmul.f32 %v607, 1.442695
        %v628 = vpow.pop %v627
        %v629 = vmul.f32 %v608, 1.442695
        %v630 = vpow.pop %v629
        %v631 = vmul.f32 %v609, 1.442695
        %v632 = vpow.pop %v631
        %v633 = vmul.f32 %v610, 1.442695
        %v634 = vpow.pop %v633
        %v635 = vmul.f32 %v611, 1.442695
        %v636 = vpow.pop %v635
        %v637 = vmul.f32 %v612, 1.442695
        %v638 = vpow.pop %v637
        %v639 = vmul.f32 %v613, 1.442695
        %v640 = vpow.pop %v639
        %v641 = vmul.f32 %v614, 1.442695
        %v642 = vpow.pop %v641
        %v643 = vmul.f32 %v615, 1.442695
        %v644 = vpow.pop %v643
        %v645 = vmul.f32 %v616, 1.442695
        %v646 = vpow.pop %v645
        %v647 = vmul.f32 %v617, 1.442695
        %v648 = vpow.pop %v647
        %v649 = vmul.f32 %v618, 1.442695
        %v650 = vpow.pop %v649
        %v651 = vadd.f32 %v620, 1.0
        %v652 = vadd.f32 %v622, 1.0
        %v653 = vadd.f32 %v624, 1.0
        %v654 = vadd.f32 %v626, 1.0
        %v655 = vadd.f32 %v628, 1.0
        %v656 = vadd.f32 %v630, 1.0
        %v657 = vadd.f32 %v632, 1.0
        %v658 = vadd.f32 %v634, 1.0
        %v659 = vadd.f32 %v636, 1.0
        %v660 = vadd.f32 %v638, 1.0
        %v661 = vadd.f32 %v640, 1.0
        %v662 = vadd.f32 %v642, 1.0
        %v663 = vadd.f32 %v644, 1.0
        %v664 = vadd.f32 %v646, 1.0
        %v665 = vadd.f32 %v648, 1.0
        %v666 = vadd.f32 %v650, 1.0
        %v667 = vrcp.pop %v651
        %v668 = vmul.f32 1.0, %v667
        %v669 = vrcp.pop %v652
        %v670 = vmul.f32 1.0, %v669
        %v671 = vrcp.pop %v653
        %v672 = vmul.f32 1.0, %v671
        %v673 = vrcp.pop %v654
        %v674 = vmul.f32 1.0, %v673
        %v675 = vrcp.pop %v655
        %v676 = vmul.f32 1.0, %v675
        %v677 = vrcp.pop %v656
        %v678 = vmul.f32 1.0, %v677
        %v679 = vrcp.pop %v657
        %v680 = vmul.f32 1.0, %v679
        %v681 = vrcp.pop %v658
        %v682 = vmul.f32 1.0, %v681
        %v683 = vrcp.pop %v659
        %v684 = vmul.f32 1.0, %v683
        %v685 = vrcp.pop %v660
        %v686 = vmul.f32 1.0, %v685
        %v687 = vrcp.pop %v661
        %v688 = vmul.f32 1.0, %v687
        %v689 = vrcp.pop %v662
        %v690 = vmul.f32 1.0, %v689
        %v691 = vrcp.pop %v663
        %v692 = vmul.f32 1.0, %v691
        %v693 = vrcp.pop %v664
        %v694 = vmul.f32 1.0, %v693
        %v695 = vrcp.pop %v665
        %v696 = vmul.f32 1.0, %v695
        %v697 = vrcp.pop %v666
        %v698 = vmul.f32 1.0, %v697
        %700 = vset.pattern.permute.xlu0 0
        %701 = vperm.xlu0 %700, %v668
        %v702 = vpop.permute.xlu0 %701
        %705 = vset.pattern.permute.xlu0 0
        %706 = vperm.xlu0 %705, %v670
        %v707 = vpop.permute.xlu0 %706
        %710 = vset.pattern.permute.xlu0 0
        %711 = vperm.xlu0 %710, %v672
        %v712 = vpop.permute.xlu0 %711
        %715 = vset.pattern.permute.xlu0 0
        %716 = vperm.xlu0 %715, %v674
        %v717 = vpop.permute.xlu0 %716
        %720 = vset.pattern.permute.xlu0 0
        %721 = vperm.xlu0 %720, %v676
        %v722 = vpop.permute.xlu0 %721
        %725 = vset.pattern.permute.xlu0 0
        %726 = vperm.xlu0 %725, %v678
        %v727 = vpop.permute.xlu0 %726
        %730 = vset.pattern.permute.xlu0 0
        %731 = vperm.xlu0 %730, %v680
        %v732 = vpop.permute.xlu0 %731
        %735 = vset.pattern.permute.xlu0 0
        %736 = vperm.xlu0 %735, %v682
        %v737 = vpop.permute.xlu0 %736
        %740 = vset.pattern.permute.xlu0 0
        %741 = vperm.xlu0 %740, %v684
        %v742 = vpop.permute.xlu0 %741
        %745 = vset.pattern.permute.xlu0 0
        %746 = vperm.xlu0 %745, %v686
        %v747 = vpop.permute.xlu0 %746
        %750 = vset.pattern.permute.xlu0 0
        %751 = vperm.xlu0 %750, %v688
        %v752 = vpop.permute.xlu0 %751
        %755 = vset.pattern.permute.xlu0 0
        %756 = vperm.xlu0 %755, %v690
        %v757 = vpop.permute.xlu0 %756
        %760 = vset.pattern.permute.xlu0 0
        %761 = vperm.xlu0 %760, %v692
        %v762 = vpop.permute.xlu0 %761
        %765 = vset.pattern.permute.xlu0 0
        %766 = vperm.xlu0 %765, %v694
        %v767 = vpop.permute.xlu0 %766
        %770 = vset.pattern.permute.xlu0 0
        %771 = vperm.xlu0 %770, %v696
        %v772 = vpop.permute.xlu0 %771
        %775 = vset.pattern.permute.xlu0 0
        %776 = vperm.xlu0 %775, %v698
        %v777 = vpop.permute.xlu0 %776
        %v779 = vmul.f32 %v346, %v702
        %v780 = vmul.f32 %v347, %v702
        %v781 = vmul.f32 %v348, %v707
        %v782 = vmul.f32 %v349, %v707
        %v783 = vmul.f32 %v350, %v712
        %v784 = vmul.f32 %v351, %v712
        %v785 = vmul.f32 %v352, %v717
        %v786 = vmul.f32 %v353, %v717
        %v787 = vmul.f32 %v354, %v722
        %v788 = vmul.f32 %v355, %v722
        %v789 = vmul.f32 %v356, %v727
        %v790 = vmul.f32 %v357, %v727
        %v791 = vmul.f32 %v358, %v732
        %v792 = vmul.f32 %v359, %v732
        %v793 = vmul.f32 %v360, %v737
        %v794 = vmul.f32 %v361, %v737
        %v795 = vmul.f32 %v362, %v742
        %v796 = vmul.f32 %v363, %v742
        %v797 = vmul.f32 %v364, %v747
        %v798 = vmul.f32 %v365, %v747
        %v799 = vmul.f32 %v366, %v752
        %v800 = vmul.f32 %v367, %v752
        %v801 = vmul.f32 %v368, %v757
        %v802 = vmul.f32 %v369, %v757
        %v803 = vmul.f32 %v370, %v762
        %v804 = vmul.f32 %v371, %v762
        %v805 = vmul.f32 %v372, %v767
        %v806 = vmul.f32 %v373, %v767
        %v807 = vmul.f32 %v374, %v772
        %v808 = vmul.f32 %v375, %v772
        %v809 = vmul.f32 %v376, %v777
        %v810 = vmul.f32 %v377, %v777
        %811 = vst [vmem:[%s174] sm:$0xff] %v779
        %812 = vst [vmem:[%s174 + $0x8] sm:$0xff] %v780
        %813 = vst [vmem:[%s174 + $0x10] sm:$0xff] %v781
        %814 = vst [vmem:[%s174 + $0x18] sm:$0xff] %v782
        %815 = vst [vmem:[%s174 + $0x20] sm:$0xff] %v783
        %816 = vst [vmem:[%s174 + $0x28] sm:$0xff] %v784
        %817 = vst [vmem:[%s174 + $0x30] sm:$0xff] %v785
        %818 = vst [vmem:[%s174 + $0x38] sm:$0xff] %v786
        %819 = vst [vmem:[%s174 + $0x40] sm:$0xff] %v787
        %820 = vst [vmem:[%s174 + $0x48] sm:$0xff] %v788
        %821 = vst [vmem:[%s174 + $0x50] sm:$0xff] %v789
        %822 = vst [vmem:[%s174 + $0x58] sm:$0xff] %v790
        %823 = vst [vmem:[%s174 + $0x60] sm:$0xff] %v791
        %824 = vst [vmem:[%s174 + $0x68] sm:$0xff] %v792
        %825 = vst [vmem:[%s174 + $0x70] sm:$0xff] %v793
        %826 = vst [vmem:[%s174 + $0x78] sm:$0xff] %v794
        %827 = vst [vmem:[%s174 + $0x80] sm:$0xff] %v795
        %828 = vst [vmem:[%s174 + $0x88] sm:$0xff] %v796
        %829 = vst [vmem:[%s174 + $0x90] sm:$0xff] %v797
        %830 = vst [vmem:[%s174 + $0x98] sm:$0xff] %v798
        %831 = vst [vmem:[%s174 + $0xa0] sm:$0xff] %v799
        %832 = vst [vmem:[%s174 + $0xa8] sm:$0xff] %v800
        %833 = vst [vmem:[%s174 + $0xb0] sm:$0xff] %v801
        %834 = vst [vmem:[%s174 + $0xb8] sm:$0xff] %v802
        %835 = vst [vmem:[%s174 + $0xc0] sm:$0xff] %v803
        %836 = vst [vmem:[%s174 + $0xc8] sm:$0xff] %v804
        %837 = vst [vmem:[%s174 + $0xd0] sm:$0xff] %v805
        %838 = vst [vmem:[%s174 + $0xd8] sm:$0xff] %v806
        %839 = vst [vmem:[%s174 + $0xe0] sm:$0xff] %v807
        %840 = vst [vmem:[%s174 + $0xe8] sm:$0xff] %v808
        %841 = vst [vmem:[%s174 + $0xf0] sm:$0xff] %v809
        %842 = vst [vmem:[%s174 + $0xf8] sm:$0xff] %v810
        %s843 = scalar_lea.vmem %s153, 256 [#allocation7]
        %v844 = vld [vmem:[%s843] sm:$0xff]
        %v845 = vld [vmem:[%s843 + $0x8] sm:$0xff]
        %v846 = vld [vmem:[%s843 + $0x10] sm:$0xff]
        %v847 = vld [vmem:[%s843 + $0x18] sm:$0xff]
        %v848 = vld [vmem:[%s843 + $0x20] sm:$0xff]
        %v849 = vld [vmem:[%s843 + $0x28] sm:$0xff]
        %v850 = vld [vmem:[%s843 + $0x30] sm:$0xff]
        %v851 = vld [vmem:[%s843 + $0x38] sm:$0xff]
        %v852 = vld [vmem:[%s843 + $0x40] sm:$0xff]
        %v853 = vld [vmem:[%s843 + $0x48] sm:$0xff]
        %v854 = vld [vmem:[%s843 + $0x50] sm:$0xff]
        %v855 = vld [vmem:[%s843 + $0x58] sm:$0xff]
        %v856 = vld [vmem:[%s843 + $0x60] sm:$0xff]
        %v857 = vld [vmem:[%s843 + $0x68] sm:$0xff]
        %v858 = vld [vmem:[%s843 + $0x70] sm:$0xff]
        %v859 = vld [vmem:[%s843 + $0x78] sm:$0xff]
        %v860 = vld [vmem:[%s843 + $0x80] sm:$0xff]
        %v861 = vld [vmem:[%s843 + $0x88] sm:$0xff]
        %v862 = vld [vmem:[%s843 + $0x90] sm:$0xff]
        %v863 = vld [vmem:[%s843 + $0x98] sm:$0xff]
        %v864 = vld [vmem:[%s843 + $0xa0] sm:$0xff]
        %v865 = vld [vmem:[%s843 + $0xa8] sm:$0xff]
        %v866 = vld [vmem:[%s843 + $0xb0] sm:$0xff]
        %v867 = vld [vmem:[%s843 + $0xb8] sm:$0xff]
        %v868 = vld [vmem:[%s843 + $0xc0] sm:$0xff]
        %v869 = vld [vmem:[%s843 + $0xc8] sm:$0xff]
        %v870 = vld [vmem:[%s843 + $0xd0] sm:$0xff]
        %v871 = vld [vmem:[%s843 + $0xd8] sm:$0xff]
        %v872 = vld [vmem:[%s843 + $0xe0] sm:$0xff]
        %v873 = vld [vmem:[%s843 + $0xe8] sm:$0xff]
        %v874 = vld [vmem:[%s843 + $0xf0] sm:$0xff]
        %v875 = vld [vmem:[%s843 + $0xf8] sm:$0xff]
        %v876 = vadd.f32 %v844, %v845
        %877 = vadd.xlane.f32.xlu0 %v876
        %v878 = vpop.xlane.xlu0 %877
        %v879 = vadd.f32 %v846, %v847
        %880 = vadd.xlane.f32.xlu0 %v879
        %v881 = vpop.xlane.xlu0 %880
        %v882 = vadd.f32 %v848, %v849
        %883 = vadd.xlane.f32.xlu0 %v882
        %v884 = vpop.xlane.xlu0 %883
        %v885 = vadd.f32 %v850, %v851
        %886 = vadd.xlane.f32.xlu0 %v885
        %v887 = vpop.xlane.xlu0 %886
        %v888 = vadd.f32 %v852, %v853
        %889 = vadd.xlane.f32.xlu0 %v888
        %v890 = vpop.xlane.xlu0 %889
        %v891 = vadd.f32 %v854, %v855
        %892 = vadd.xlane.f32.xlu0 %v891
        %v893 = vpop.xlane.xlu0 %892
        %v894 = vadd.f32 %v856, %v857
        %895 = vadd.xlane.f32.xlu0 %v894
        %v896 = vpop.xlane.xlu0 %895
        %v897 = vadd.f32 %v858, %v859
        %898 = vadd.xlane.f32.xlu0 %v897
        %v899 = vpop.xlane.xlu0 %898
        %v900 = vadd.f32 %v860, %v861
        %901 = vadd.xlane.f32.xlu0 %v900
        %v902 = vpop.xlane.xlu0 %901
        %v903 = vadd.f32 %v862, %v863
        %904 = vadd.xlane.f32.xlu0 %v903
        %v905 = vpop.xlane.xlu0 %904
        %v906 = vadd.f32 %v864, %v865
        %907 = vadd.xlane.f32.xlu0 %v906
        %v908 = vpop.xlane.xlu0 %907
        %v909 = vadd.f32 %v866, %v867
        %910 = vadd.xlane.f32.xlu0 %v909
        %v911 = vpop.xlane.xlu0 %910
        %v912 = vadd.f32 %v868, %v869
        %913 = vadd.xlane.f32.xlu0 %v912
        %v914 = vpop.xlane.xlu0 %913
        %v915 = vadd.f32 %v870, %v871
        %916 = vadd.xlane.f32.xlu0 %v915
        %v917 = vpop.xlane.xlu0 %916
        %v918 = vadd.f32 %v872, %v873
        %919 = vadd.xlane.f32.xlu0 %v918
        %v920 = vpop.xlane.xlu0 %919
        %v921 = vadd.f32 %v874, %v875
        %922 = vadd.xlane.f32.xlu0 %v921
        %v923 = vpop.xlane.xlu0 %922
        %v924 = vmul.f32 %v878, 0.00390625
        %v925 = vmul.f32 %v881, 0.00390625
        %v926 = vmul.f32 %v884, 0.00390625
        %v927 = vmul.f32 %v887, 0.00390625
        %v928 = vmul.f32 %v890, 0.00390625
        %v929 = vmul.f32 %v893, 0.00390625
        %v930 = vmul.f32 %v896, 0.00390625
        %v931 = vmul.f32 %v899, 0.00390625
        %v932 = vmul.f32 %v902, 0.00390625
        %v933 = vmul.f32 %v905, 0.00390625
        %v934 = vmul.f32 %v908, 0.00390625
        %v935 = vmul.f32 %v911, 0.00390625
        %v936 = vmul.f32 %v914, 0.00390625
        %v937 = vmul.f32 %v917, 0.00390625
        %v938 = vmul.f32 %v920, 0.00390625
        %v939 = vmul.f32 %v923, 0.00390625
        %v940 = vld [vmem:[#allocation2] sm:$0xff]
        %v941 = vld [vmem:[#allocation2 + $0x8] sm:$0xff]
        %v942 = vld [vmem:[#allocation2 + $0x10] sm:$0xff]
        %v943 = vld [vmem:[#allocation2 + $0x18] sm:$0xff]
        %v944 = vld [vmem:[#allocation2 + $0x20] sm:$0xff]
        %v945 = vld [vmem:[#allocation2 + $0x28] sm:$0xff]
        %v946 = vld [vmem:[#allocation2 + $0x30] sm:$0xff]
        %v947 = vld [vmem:[#allocation2 + $0x38] sm:$0xff]
        %v948 = vld [vmem:[#allocation2 + $0x40] sm:$0xff]
        %v949 = vld [vmem:[#allocation2 + $0x48] sm:$0xff]
        %v950 = vld [vmem:[#allocation2 + $0x50] sm:$0xff]
        %v951 = vld [vmem:[#allocation2 + $0x58] sm:$0xff]
        %v952 = vld [vmem:[#allocation2 + $0x60] sm:$0xff]
        %v953 = vld [vmem:[#allocation2 + $0x68] sm:$0xff]
        %v954 = vld [vmem:[#allocation2 + $0x70] sm:$0xff]
        %v955 = vld [vmem:[#allocation2 + $0x78] sm:$0xff]
        %956 = vmatprep.subr.mxu0 0.0
        %957 = vmatpush1.msra.mxu0 %v924
        %958 = vmatprep.subr.mxu0 0.0
        %959 = vmatpush1.msra.mxu0 %v925
        %960 = vmatprep.subr.mxu0 0.0
        %961 = vmatpush1.msra.mxu0 %v926
        %962 = vmatprep.subr.mxu0 0.0
        %963 = vmatpush1.msra.mxu0 %v927
        %964 = vmatprep.subr.mxu0 0.0
        %965 = vmatpush1.msra.mxu0 %v928
        %966 = vmatprep.subr.mxu0 0.0
        %967 = vmatpush1.msra.mxu0 %v929
        %968 = vmatprep.subr.mxu0 0.0
        %969 = vmatpush1.msra.mxu0 %v930
        %970 = vmatprep.subr.mxu0 0.0
        %971 = vmatpush1.msra.mxu0 %v931
        %972 = vmatprep.subr.mxu0 0.0
        %973 = vmatpush1.msra.mxu0 %v932
        %974 = vmatprep.subr.mxu0 0.0
        %975 = vmatpush1.msra.mxu0 %v933
        %976 = vmatprep.subr.mxu0 0.0
        %977 = vmatpush1.msra.mxu0 %v934
        %978 = vmatprep.subr.mxu0 0.0
        %979 = vmatpush1.msra.mxu0 %v935
        %980 = vmatprep.subr.mxu0 0.0
        %981 = vmatpush1.msra.mxu0 %v936
        %982 = vmatprep.subr.mxu0 0.0
        %983 = vmatpush1.msra.mxu0 %v937
        %984 = vmatprep.subr.mxu0 0.0
        %985 = vmatpush1.msra.mxu0 %v938
        %986 = vmatprep.subr.mxu0 0.0
        %987 = vmatpush1.msra.mxu0 %v939
        %988 = vmatprep.subr.mxu0 0.0
        %989 = vmatpush1.msra.mxu0 0.0
        %990 = vmatprep.subr.mxu0 0.0
        %991 = vmatpush1.msra.mxu0 0.0
        %992 = vmatprep.subr.mxu0 0.0
        %993 = vmatpush1.msra.mxu0 0.0
        %994 = vmatprep.subr.mxu0 0.0
        %995 = vmatpush1.msra.mxu0 0.0
        %996 = vmatprep.subr.mxu0 0.0
        %997 = vmatpush1.msra.mxu0 0.0
        %998 = vmatprep.subr.mxu0 0.0
        %999 = vmatpush1.msra.mxu0 0.0
        %1000 = vmatprep.subr.mxu0 0.0
        %1001 = vmatpush1.msra.mxu0 0.0
        %1002 = vmatprep.subr.mxu0 0.0
        %1003 = vmatpush1.msra.mxu0 0.0
        %1004 = vmatprep.subr.mxu0 0.0
        %1005 = vmatpush1.msra.mxu0 0.0
        %1006 = vmatprep.subr.mxu0 0.0
        %1007 = vmatpush1.msra.mxu0 0.0
        %1008 = vmatprep.subr.mxu0 0.0
        %1009 = vmatpush1.msra.mxu0 0.0
        %1010 = vmatprep.subr.mxu0 0.0
        %1011 = vmatpush1.msra.mxu0 0.0
        %1012 = vmatprep.subr.mxu0 0.0
        %1013 = vmatpush1.msra.mxu0 0.0
        %1014 = vmatprep.subr.mxu0 0.0
        %1015 = vmatpush1.msra.mxu0 0.0
        %1016 = vmatprep.subr.mxu0 0.0
        %1017 = vmatpush1.msra.mxu0 0.0
        %1018 = vmatprep.subr.mxu0 0.0
        %1019 = vmatpush1.msra.mxu0 0.0
        %1020 = vmatprep.mubr.f32.mxu0 0.0
        %1021 = vmatmul.mubr.f32.gmra.mrb[0].mxu0 %v940
        %v1022 = vpop.f32.mrb[0].mxu0
        %v1023 = vadd.f32 0.0, %v1022
        %v1024 = vpop.f32.mrb[0].mxu0
        %1025 = vmatprep.mubr.f32.mxu0 0.0
        %1026 = vmatmul.mubr.f32.gmra.mrb[0].mxu0 %v941
        %v1027 = vpop.f32.mrb[0].mxu0
        %v1028 = vadd.f32 0.0, %v1027
        %v1029 = vpop.f32.mrb[0].mxu0
        %1030 = vmatprep.mubr.f32.mxu0 0.0
        %1031 = vmatmul.mubr.f32.gmra.mrb[0].mxu0 %v942
        %v1032 = vpop.f32.mrb[0].mxu0
        %v1033 = vadd.f32 0.0, %v1032
        %v1034 = vpop.f32.mrb[0].mxu0
        %1035 = vmatprep.mubr.f32.mxu0 0.0
        %1036 = vmatmul.mubr.f32.gmra.mrb[0].mxu0 %v943
        %v1037 = vpop.f32.mrb[0].mxu0
        %v1038 = vadd.f32 0.0, %v1037
        %v1039 = vpop.f32.mrb[0].mxu0
        %1040 = vmatprep.mubr.f32.mxu0 0.0
        %1041 = vmatmul.mubr.f32.gmra.mrb[0].mxu0 %v944
        %v1042 = vpop.f32.mrb[0].mxu0
        %v1043 = vadd.f32 0.0, %v1042
        %v1044 = vpop.f32.mrb[0].mxu0
        %1045 = vmatprep.mubr.f32.mxu0 0.0
        %1046 = vmatmul.mubr.f32.gmra.mrb[0].mxu0 %v945
        %v1047 = vpop.f32.mrb[0].mxu0
        %v1048 = vadd.f32 0.0, %v1047
        %v1049 = vpop.f32.mrb[0].mxu0
        %1050 = vmatprep.mubr.f32.mxu0 0.0
        %1051 = vmatmul.mubr.f32.gmra.mrb[0].mxu0 %v946
        %v1052 = vpop.f32.mrb[0].mxu0
        %v1053 = vadd.f32 0.0, %v1052
        %v1054 = vpop.f32.mrb[0].mxu0
        %1055 = vmatprep.mubr.f32.mxu0 0.0
        %1056 = vmatmul.mubr.f32.gmra.mrb[0].mxu0 %v947
        %v1057 = vpop.f32.mrb[0].mxu0
        %v1058 = vadd.f32 0.0, %v1057
        %v1059 = vpop.f32.mrb[0].mxu0
        %1060 = vmatprep.mubr.f32.mxu0 0.0
        %1061 = vmatmul.mubr.f32.gmra.mrb[0].mxu0 %v948
        %v1062 = vpop.f32.mrb[0].mxu0
        %v1063 = vadd.f32 0.0, %v1062
        %v1064 = vpop.f32.mrb[0].mxu0
        %1065 = vmatprep.mubr.f32.mxu0 0.0
        %1066 = vmatmul.mubr.f32.gmra.mrb[0].mxu0 %v949
        %v1067 = vpop.f32.mrb[0].mxu0
        %v1068 = vadd.f32 0.0, %v1067
        %v1069 = vpop.f32.mrb[0].mxu0
        %1070 = vmatprep.mubr.f32.mxu0 0.0
        %1071 = vmatmul.mubr.f32.gmra.mrb[0].mxu0 %v950
        %v1072 = vpop.f32.mrb[0].mxu0
        %v1073 = vadd.f32 0.0, %v1072
        %v1074 = vpop.f32.mrb[0].mxu0
        %1075 = vmatprep.mubr.f32.mxu0 0.0
        %1076 = vmatmul.mubr.f32.gmra.mrb[0].mxu0 %v951
        %v1077 = vpop.f32.mrb[0].mxu0
        %v1078 = vadd.f32 0.0, %v1077
        %v1079 = vpop.f32.mrb[0].mxu0
        %1080 = vmatprep.mubr.f32.mxu0 0.0
        %1081 = vmatmul.mubr.f32.gmra.mrb[0].mxu0 %v952
        %v1082 = vpop.f32.mrb[0].mxu0
        %v1083 = vadd.f32 0.0, %v1082
        %v1084 = vpop.f32.mrb[0].mxu0
        %1085 = vmatprep.mubr.f32.mxu0 0.0
        %1086 = vmatmul.mubr.f32.gmra.mrb[0].mxu0 %v953
        %v1087 = vpop.f32.mrb[0].mxu0
        %v1088 = vadd.f32 0.0, %v1087
        %v1089 = vpop.f32.mrb[0].mxu0
        %1090 = vmatprep.mubr.f32.mxu0 0.0
        %1091 = vmatmul.mubr.f32.gmra.mrb[0].mxu0 %v954
        %v1092 = vpop.f32.mrb[0].mxu0
        %v1093 = vadd.f32 0.0, %v1092
        %v1094 = vpop.f32.mrb[0].mxu0
        %1095 = vmatprep.mubr.f32.mxu0 0.0
        %1096 = vmatmul.mubr.f32.gmra.mrb[0].mxu0 %v955
        %v1097 = vpop.f32.mrb[0].mxu0
        %v1098 = vadd.f32 0.0, %v1097
        %v1099 = vpop.f32.mrb[0].mxu0
        %1100 = vdwg.mxu0
        %v1101 = vsub.f32 0.0, %v1023
        %v1102 = vsub.f32 0.0, %v1028
        %v1103 = vsub.f32 0.0, %v1033
        %v1104 = vsub.f32 0.0, %v1038
        %v1105 = vsub.f32 0.0, %v1043
        %v1106 = vsub.f32 0.0, %v1048
        %v1107 = vsub.f32 0.0, %v1053
        %v1108 = vsub.f32 0.0, %v1058
        %v1109 = vsub.f32 0.0, %v1063
        %v1110 = vsub.f32 0.0, %v1068
        %v1111 = vsub.f32 0.0, %v1073
        %v1112 = vsub.f32 0.0, %v1078
        %v1113 = vsub.f32 0.0, %v1083
        %v1114 = vsub.f32 0.0, %v1088
        %v1115 = vsub.f32 0.0, %v1093
        %v1116 = vsub.f32 0.0, %v1098
        %v1117 = vmul.f32 %v1101, 1.442695
        %v1118 = vpow.pop %v1117
        %v1119 = vmul.f32 %v1102, 1.442695
        %v1120 = vpow.pop %v1119
        %v1121 = vmul.f32 %v1103, 1.442695
        %v1122 = vpow.pop %v1121
        %v1123 = vmul.f32 %v1104, 1.442695
        %v1124 = vpow.pop %v1123
        %v1125 = vmul.f32 %v1105, 1.442695
        %v1126 = vpow.pop %v1125
        %v1127 = vmul.f32 %v1106, 1.442695
        %v1128 = vpow.pop %v1127
        %v1129 = vmul.f32 %v1107, 1.442695
        %v1130 = vpow.pop %v1129
        %v1131 = vmul.f32 %v1108, 1.442695
        %v1132 = vpow.pop %v1131
        %v1133 = vmul.f32 %v1109, 1.442695
        %v1134 = vpow.pop %v1133
        %v1135 = vmul.f32 %v1110, 1.442695
        %v1136 = vpow.pop %v1135
        %v1137 = vmul.f32 %v1111, 1.442695
        %v1138 = vpow.pop %v1137
        %v1139 = vmul.f32 %v1112, 1.442695
        %v1140 = vpow.pop %v1139
        %v1141 = vmul.f32 %v1113, 1.442695
        %v1142 = vpow.pop %v1141
        %v1143 = vmul.f32 %v1114, 1.442695
        %v1144 = vpow.pop %v1143
        %v1145 = vmul.f32 %v1115, 1.442695
        %v1146 = vpow.pop %v1145
        %v1147 = vmul.f32 %v1116, 1.442695
        %v1148 = vpow.pop %v1147
        %v1149 = vadd.f32 %v1118, 1.0
        %v1150 = vadd.f32 %v1120, 1.0
        %v1151 = vadd.f32 %v1122, 1.0
        %v1152 = vadd.f32 %v1124, 1.0
        %v1153 = vadd.f32 %v1126, 1.0
        %v1154 = vadd.f32 %v1128, 1.0
        %v1155 = vadd.f32 %v1130, 1.0
        %v1156 = vadd.f32 %v1132, 1.0
        %v1157 = vadd.f32 %v1134, 1.0
        %v1158 = vadd.f32 %v1136, 1.0
        %v1159 = vadd.f32 %v1138, 1.0
        %v1160 = vadd.f32 %v1140, 1.0
        %v1161 = vadd.f32 %v1142, 1.0
        %v1162 = vadd.f32 %v1144, 1.0
        %v1163 = vadd.f32 %v1146, 1.0
        %v1164 = vadd.f32 %v1148, 1.0
        %v1165 = vrcp.pop %v1149
        %v1166 = vmul.f32 1.0, %v1165
        %v1167 = vrcp.pop %v1150
        %v1168 = vmul.f32 1.0, %v1167
        %v1169 = vrcp.pop %v1151
        %v1170 = vmul.f32 1.0, %v1169
        %v1171 = vrcp.pop %v1152
        %v1172 = vmul.f32 1.0, %v1171
        %v1173 = vrcp.pop %v1153
        %v1174 = vmul.f32 1.0, %v1173
        %v1175 = vrcp.pop %v1154
        %v1176 = vmul.f32 1.0, %v1175
        %v1177 = vrcp.pop %v1155
        %v1178 = vmul.f32 1.0, %v1177
        %v1179 = vrcp.pop %v1156
        %v1180 = vmul.f32 1.0, %v1179
        %v1181 = vrcp.pop %v1157
        %v1182 = vmul.f32 1.0, %v1181
        %v1183 = vrcp.pop %v1158
        %v1184 = vmul.f32 1.0, %v1183
        %v1185 = vrcp.pop %v1159
        %v1186 = vmul.f32 1.0, %v1185
        %v1187 = vrcp.pop %v1160
        %v1188 = vmul.f32 1.0, %v1187
        %v1189 = vrcp.pop %v1161
        %v1190 = vmul.f32 1.0, %v1189
        %v1191 = vrcp.pop %v1162
        %v1192 = vmul.f32 1.0, %v1191
        %v1193 = vrcp.pop %v1163
        %v1194 = vmul.f32 1.0, %v1193
        %v1195 = vrcp.pop %v1164
        %v1196 = vmul.f32 1.0, %v1195
        %1198 = vset.pattern.permute.xlu0 0
        %1199 = vperm.xlu0 %1198, %v1166
        %v1200 = vpop.permute.xlu0 %1199
        %1203 = vset.pattern.permute.xlu0 0
        %1204 = vperm.xlu0 %1203, %v1168
        %v1205 = vpop.permute.xlu0 %1204
        %1208 = vset.pattern.permute.xlu0 0
        %1209 = vperm.xlu0 %1208, %v1170
        %v1210 = vpop.permute.xlu0 %1209
        %1213 = vset.pattern.permute.xlu0 0
        %1214 = vperm.xlu0 %1213, %v1172
        %v1215 = vpop.permute.xlu0 %1214
        %1218 = vset.pattern.permute.xlu0 0
        %1219 = vperm.xlu0 %1218, %v1174
        %v1220 = vpop.permute.xlu0 %1219
        %1223 = vset.pattern.permute.xlu0 0
        %1224 = vperm.xlu0 %1223, %v1176
        %v1225 = vpop.permute.xlu0 %1224
        %1228 = vset.pattern.permute.xlu0 0
        %1229 = vperm.xlu0 %1228, %v1178
        %v1230 = vpop.permute.xlu0 %1229
        %1233 = vset.pattern.permute.xlu0 0
        %1234 = vperm.xlu0 %1233, %v1180
        %v1235 = vpop.permute.xlu0 %1234
        %1238 = vset.pattern.permute.xlu0 0
        %1239 = vperm.xlu0 %1238, %v1182
        %v1240 = vpop.permute.xlu0 %1239
        %1243 = vset.pattern.permute.xlu0 0
        %1244 = vperm.xlu0 %1243, %v1184
        %v1245 = vpop.permute.xlu0 %1244
        %1248 = vset.pattern.permute.xlu0 0
        %1249 = vperm.xlu0 %1248, %v1186
        %v1250 = vpop.permute.xlu0 %1249
        %1253 = vset.pattern.permute.xlu0 0
        %1254 = vperm.xlu0 %1253, %v1188
        %v1255 = vpop.permute.xlu0 %1254
        %1258 = vset.pattern.permute.xlu0 0
        %1259 = vperm.xlu0 %1258, %v1190
        %v1260 = vpop.permute.xlu0 %1259
        %1263 = vset.pattern.permute.xlu0 0
        %1264 = vperm.xlu0 %1263, %v1192
        %v1265 = vpop.permute.xlu0 %1264
        %1268 = vset.pattern.permute.xlu0 0
        %1269 = vperm.xlu0 %1268, %v1194
        %v1270 = vpop.permute.xlu0 %1269
        %1273 = vset.pattern.permute.xlu0 0
        %1274 = vperm.xlu0 %1273, %v1196
        %v1275 = vpop.permute.xlu0 %1274
        %v1277 = vmul.f32 %v844, %v1200
        %v1278 = vmul.f32 %v845, %v1200
        %v1279 = vmul.f32 %v846, %v1205
        %v1280 = vmul.f32 %v847, %v1205
        %v1281 = vmul.f32 %v848, %v1210
        %v1282 = vmul.f32 %v849, %v1210
        %v1283 = vmul.f32 %v850, %v1215
        %v1284 = vmul.f32 %v851, %v1215
        %v1285 = vmul.f32 %v852, %v1220
        %v1286 = vmul.f32 %v853, %v1220
        %v1287 = vmul.f32 %v854, %v1225
        %v1288 = vmul.f32 %v855, %v1225
        %v1289 = vmul.f32 %v856, %v1230
        %v1290 = vmul.f32 %v857, %v1230
        %v1291 = vmul.f32 %v858, %v1235
        %v1292 = vmul.f32 %v859, %v1235
        %v1293 = vmul.f32 %v860, %v1240
        %v1294 = vmul.f32 %v861, %v1240
        %v1295 = vmul.f32 %v862, %v1245
        %v1296 = vmul.f32 %v863, %v1245
        %v1297 = vmul.f32 %v864, %v1250
        %v1298 = vmul.f32 %v865, %v1250
        %v1299 = vmul.f32 %v866, %v1255
        %v1300 = vmul.f32 %v867, %v1255
        %v1301 = vmul.f32 %v868, %v1260
        %v1302 = vmul.f32 %v869, %v1260
        %v1303 = vmul.f32 %v870, %v1265
        %v1304 = vmul.f32 %v871, %v1265
        %v1305 = vmul.f32 %v872, %v1270
        %v1306 = vmul.f32 %v873, %v1270
        %v1307 = vmul.f32 %v874, %v1275
        %v1308 = vmul.f32 %v875, %v1275
        %s1309 = scalar_lea.vmem %s174, 256 [#allocation8]
        %1310 = vst [vmem:[%s1309] sm:$0xff] %v1277
        %1311 = vst [vmem:[%s1309 + $0x8] sm:$0xff] %v1278
        %1312 = vst [vmem:[%s1309 + $0x10] sm:$0xff] %v1279
        %1313 = vst [vmem:[%s1309 + $0x18] sm:$0xff] %v1280
        %1314 = vst [vmem:[%s1309 + $0x20] sm:$0xff] %v1281
        %1315 = vst [vmem:[%s1309 + $0x28] sm:$0xff] %v1282
        %1316 = vst [vmem:[%s1309 + $0x30] sm:$0xff] %v1283
        %1317 = vst [vmem:[%s1309 + $0x38] sm:$0xff] %v1284
        %1318 = vst [vmem:[%s1309 + $0x40] sm:$0xff] %v1285
        %1319 = vst [vmem:[%s1309 + $0x48] sm:$0xff] %v1286
        %1320 = vst [vmem:[%s1309 + $0x50] sm:$0xff] %v1287
        %1321 = vst [vmem:[%s1309 + $0x58] sm:$0xff] %v1288
        %1322 = vst [vmem:[%s1309 + $0x60] sm:$0xff] %v1289
        %1323 = vst [vmem:[%s1309 + $0x68] sm:$0xff] %v1290
        %1324 = vst [vmem:[%s1309 + $0x70] sm:$0xff] %v1291
        %1325 = vst [vmem:[%s1309 + $0x78] sm:$0xff] %v1292
        %1326 = vst [vmem:[%s1309 + $0x80] sm:$0xff] %v1293
        %1327 = vst [vmem:[%s1309 + $0x88] sm:$0xff] %v1294
        %1328 = vst [vmem:[%s1309 + $0x90] sm:$0xff] %v1295
        %1329 = vst [vmem:[%s1309 + $0x98] sm:$0xff] %v1296
        %1330 = vst [vmem:[%s1309 + $0xa0] sm:$0xff] %v1297
        %1331 = vst [vmem:[%s1309 + $0xa8] sm:$0xff] %v1298
        %1332 = vst [vmem:[%s1309 + $0xb0] sm:$0xff] %v1299
        %1333 = vst [vmem:[%s1309 + $0xb8] sm:$0xff] %v1300
        %1334 = vst [vmem:[%s1309 + $0xc0] sm:$0xff] %v1301
        %1335 = vst [vmem:[%s1309 + $0xc8] sm:$0xff] %v1302
        %1336 = vst [vmem:[%s1309 + $0xd0] sm:$0xff] %v1303
        %1337 = vst [vmem:[%s1309 + $0xd8] sm:$0xff] %v1304
        %1338 = vst [vmem:[%s1309 + $0xe0] sm:$0xff] %v1305
        %1339 = vst [vmem:[%s1309 + $0xe8] sm:$0xff] %v1306
        %1340 = vst [vmem:[%s1309 + $0xf0] sm:$0xff] %v1307
        %1341 = vst [vmem:[%s1309 + $0xf8] sm:$0xff] %v1308
        %s1342 = scalar_lea.vmem %s153, 512 [#allocation7]
        %v1343 = vld [vmem:[%s1342] sm:$0xff]
        %v1344 = vld [vmem:[%s1342 + $0x8] sm:$0xff]
        %v1345 = vld [vmem:[%s1342 + $0x10] sm:$0xff]
        %v1346 = vld [vmem:[%s1342 + $0x18] sm:$0xff]
        %v1347 = vld [vmem:[%s1342 + $0x20] sm:$0xff]
        %v1348 = vld [vmem:[%s1342 + $0x28] sm:$0xff]
        %v1349 = vld [vmem:[%s1342 + $0x30] sm:$0xff]
        %v1350 = vld [vmem:[%s1342 + $0x38] sm:$0xff]
        %v1351 = vld [vmem:[%s1342 + $0x40] sm:$0xff]
        %v1352 = vld [vmem:[%s1342 + $0x48] sm:$0xff]
        %v1353 = vld [vmem:[%s1342 + $0x50] sm:$0xff]
        %v1354 = vld [vmem:[%s1342 + $0x58] sm:$0xff]
        %v1355 = vld [vmem:[%s1342 + $0x60] sm:$0xff]
        %v1356 = vld [vmem:[%s1342 + $0x68] sm:$0xff]
        %v1357 = vld [vmem:[%s1342 + $0x70] sm:$0xff]
        %v1358 = vld [vmem:[%s1342 + $0x78] sm:$0xff]
        %v1359 = vld [vmem:[%s1342 + $0x80] sm:$0xff]
        %v1360 = vld [vmem:[%s1342 + $0x88] sm:$0xff]
        %v1361 = vld [vmem:[%s1342 + $0x90] sm:$0xff]
        %v1362 = vld [vmem:[%s1342 + $0x98] sm:$0xff]
        %v1363 = vld [vmem:[%s1342 + $0xa0] sm:$0xff]
        %v1364 = vld [vmem:[%s1342 + $0xa8] sm:$0xff]
        %v1365 = vld [vmem:[%s1342 + $0xb0] sm:$0xff]
        %v1366 = vld [vmem:[%s1342 + $0xb8] sm:$0xff]
        %v1367 = vld [vmem:[%s1342 + $0xc0] sm:$0xff]
        %v1368 = vld [vmem:[%s1342 + $0xc8] sm:$0xff]
        %v1369 = vld [vmem:[%s1342 + $0xd0] sm:$0xff]
        %v1370 = vld [vmem:[%s1342 + $0xd8] sm:$0xff]
        %v1371 = vld [vmem:[%s1342 + $0xe0] sm:$0xff]
        %v1372 = vld [vmem:[%s1342 + $0xe8] sm:$0xff]
        %v1373 = vld [vmem:[%s1342 + $0xf0] sm:$0xff]
        %v1374 = vld [vmem:[%s1342 + $0xf8] sm:$0xff]
        %v1375 = vadd.f32 %v1343, %v1344
        %1376 = vadd.xlane.f32.xlu0 %v1375
        %v1377 = vpop.xlane.xlu0 %1376
        %v1378 = vadd.f32 %v1345, %v1346
        %1379 = vadd.xlane.f32.xlu0 %v1378
        %v1380 = vpop.xlane.xlu0 %1379
        %v1381 = vadd.f32 %v1347, %v1348
        %1382 = vadd.xlane.f32.xlu0 %v1381
        %v1383 = vpop.xlane.xlu0 %1382
        %v1384 = vadd.f32 %v1349, %v1350
        %1385 = vadd.xlane.f32.xlu0 %v1384
        %v1386 = vpop.xlane.xlu0 %1385
        %v1387 = vadd.f32 %v1351, %v1352
        %1388 = vadd.xlane.f32.xlu0 %v1387
        %v1389 = vpop.xlane.xlu0 %1388
        %v1390 = vadd.f32 %v1353, %v1354
        %1391 = vadd.xlane.f32.xlu0 %v1390
        %v1392 = vpop.xlane.xlu0 %1391
        %v1393 = vadd.f32 %v1355, %v1356
        %1394 = vadd.xlane.f32.xlu0 %v1393
        %v1395 = vpop.xlane.xlu0 %1394
        %v1396 = vadd.f32 %v1357, %v1358
        %1397 = vadd.xlane.f32.xlu0 %v1396
        %v1398 = vpop.xlane.xlu0 %1397
        %v1399 = vadd.f32 %v1359, %v1360
        %1400 = vadd.xlane.f32.xlu0 %v1399
        %v1401 = vpop.xlane.xlu0 %1400
        %v1402 = vadd.f32 %v1361, %v1362
        %1403 = vadd.xlane.f32.xlu0 %v1402
        %v1404 = vpop.xlane.xlu0 %1403
        %v1405 = vadd.f32 %v1363, %v1364
        %1406 = vadd.xlane.f32.xlu0 %v1405
        %v1407 = vpop.xlane.xlu0 %1406
        %v1408 = vadd.f32 %v1365, %v1366
        %1409 = vadd.xlane.f32.xlu0 %v1408
        %v1410 = vpop.xlane.xlu0 %1409
        %v1411 = vadd.f32 %v1367, %v1368
        %1412 = vadd.xlane.f32.xlu0 %v1411
        %v1413 = vpop.xlane.xlu0 %1412
        %v1414 = vadd.f32 %v1369, %v1370
        %1415 = vadd.xlane.f32.xlu0 %v1414
        %v1416 = vpop.xlane.xlu0 %1415
        %v1417 = vadd.f32 %v1371, %v1372
        %1418 = vadd.xlane.f32.xlu0 %v1417
        %v1419 = vpop.xlane.xlu0 %1418
        %v1420 = vadd.f32 %v1373, %v1374
        %1421 = vadd.xlane.f32.xlu0 %v1420
        %v1422 = vpop.xlane.xlu0 %1421
        %v1423 = vmul.f32 %v1377, 0.00390625
        %v1424 = vmul.f32 %v1380, 0.00390625
        %v1425 = vmul.f32 %v1383, 0.00390625
        %v1426 = vmul.f32 %v1386, 0.00390625
        %v1427 = vmul.f32 %v1389, 0.00390625
        %v1428 = vmul.f32 %v1392, 0.00390625
        %v1429 = vmul.f32 %v1395, 0.00390625
        %v1430 = vmul.f32 %v1398, 0.00390625
        %v1431 = vmul.f32 %v1401, 0.00390625
        %v1432 = vmul.f32 %v1404, 0.00390625
        %v1433 = vmul.f32 %v1407, 0.00390625
        %v1434 = vmul.f32 %v1410, 0.00390625
        %v1435 = vmul.f32 %v1413, 0.00390625
        %v1436 = vmul.f32 %v1416, 0.00390625
        %v1437 = vmul.f32 %v1419, 0.00390625
        %v1438 = vmul.f32 %v1422, 0.00390625
        %v1439 = vld [vmem:[#allocation2] sm:$0xff]
        %v1440 = vld [vmem:[#allocation2 + $0x8] sm:$0xff]
        %v1441 = vld [vmem:[#allocation2 + $0x10] sm:$0xff]
        %v1442 = vld [vmem:[#allocation2 + $0x18] sm:$0xff]
        %v1443 = vld [vmem:[#allocation2 + $0x20] sm:$0xff]
        %v1444 = vld [vmem:[#allocation2 + $0x28] sm:$0xff]
        %v1445 = vld [vmem:[#allocation2 + $0x30] sm:$0xff]
        %v1446 = vld [vmem:[#allocation2 + $0x38] sm:$0xff]
        %v1447 = vld [vmem:[#allocation2 + $0x40] sm:$0xff]
        %v1448 = vld [vmem:[#allocation2 + $0x48] sm:$0xff]
        %v1449 = vld [vmem:[#allocation2 + $0x50] sm:$0xff]
        %v1450 = vld [vmem:[#allocation2 + $0x58] sm:$0xff]
        %v1451 = vld [vmem:[#allocation2 + $0x60] sm:$0xff]
        %v1452 = vld [vmem:[#allocation2 + $0x68] sm:$0xff]
        %v1453 = vld [vmem:[#allocation2 + $0x70] sm:$0xff]
        %v1454 = vld [vmem:[#allocation2 + $0x78] sm:$0xff]
        %1455 = vmatprep.subr.mxu0 0.0
        %1456 = vmatpush1.msra.mxu0 %v1423
        %1457 = vmatprep.subr.mxu0 0.0
        %1458 = vmatpush1.msra.mxu0 %v1424
        %1459 = vmatprep.subr.mxu0 0.0
        %1460 = vmatpush1.msra.mxu0 %v1425
        %1461 = vmatprep.subr.mxu0 0.0
        %1462 = vmatpush1.msra.mxu0 %v1426
        %1463 = vmatprep.subr.mxu0 0.0
        %1464 = vmatpush1.msra.mxu0 %v1427
        %1465 = vmatprep.subr.mxu0 0.0
        %1466 = vmatpush1.msra.mxu0 %v1428
        %1467 = vmatprep.subr.mxu0 0.0
        %1468 = vmatpush1.msra.mxu0 %v1429
        %1469 = vmatprep.subr.mxu0 0.0
        %1470 = vmatpush1.msra.mxu0 %v1430
        %1471 = vmatprep.subr.mxu0 0.0
        %1472 = vmatpush1.msra.mxu0 %v1431
        %1473 = vmatprep.subr.mxu0 0.0
        %1474 = vmatpush1.msra.mxu0 %v1432
        %1475 = vmatprep.subr.mxu0 0.0
        %1476 = vmatpush1.msra.mxu0 %v1433
        %1477 = vmatprep.subr.mxu0 0.0
        %1478 = vmatpush1.msra.mxu0 %v1434
        %1479 = vmatprep.subr.mxu0 0.0
        %1480 = vmatpush1.msra.mxu0 %v1435
        %1481 = vmatprep.subr.mxu0 0.0
        %1482 = vmatpush1.msra.mxu0 %v1436
        %1483 = vmatprep.subr.mxu0 0.0
        %1484 = vmatpush1.msra.mxu0 %v1437
        %1485 = vmatprep.subr.mxu0 0.0
        %1486 = vmatpush1.msra.mxu0 %v1438
        %1487 = vmatprep.subr.mxu0 0.0
        %1488 = vmatpush1.msra.mxu0 0.0
        %1489 = vmatprep.subr.mxu0 0.0
        %1490 = vmatpush1.msra.mxu0 0.0
        %1491 = vmatprep.subr.mxu0 0.0
        %1492 = vmatpush1.msra.mxu0 0.0
        %1493 = vmatprep.subr.mxu0 0.0
        %1494 = vmatpush1.msra.mxu0 0.0
        %1495 = vmatprep.subr.mxu0 0.0
        %1496 = vmatpush1.msra.mxu0 0.0
        %1497 = vmatprep.subr.mxu0 0.0
        %1498 = vmatpush1.msra.mxu0 0.0
        %1499 = vmatprep.subr.mxu0 0.0
        %1500 = vmatpush1.msra.mxu0 0.0
        %1501 = vmatprep.subr.mxu0 0.0
        %1502 = vmatpush1.msra.mxu0 0.0
        %1503 = vmatprep.subr.mxu0 0.0
        %1504 = vmatpush1.msra.mxu0 0.0
        %1505 = vmatprep.subr.mxu0 0.0
        %1506 = vmatpush1.msra.mxu0 0.0
        %1507 = vmatprep.subr.mxu0 0.0
        %1508 = vmatpush1.msra.mxu0 0.0
        %1509 = vmatprep.subr.mxu0 0.0
        %1510 = vmatpush1.msra.mxu0 0.0
        %1511 = vmatprep.subr.mxu0 0.0
        %1512 = vmatpush1.msra.mxu0 0.0
        %1513 = vmatprep.subr.mxu0 0.0
        %1514 = vmatpush1.msra.mxu0 0.0
        %1515 = vmatprep.subr.mxu0 0.0
        %1516 = vmatpush1.msra.mxu0 0.0
        %1517 = vmatprep.subr.mxu0 0.0
        %1518 = vmatpush1.msra.mxu0 0.0
        %1519 = vmatprep.mubr.f32.mxu0 0.0
        %1520 = vmatmul.mubr.f32.gmra.mrb[0].mxu0 %v1439
        %v1521 = vpop.f32.mrb[0].mxu0
        %v1522 = vadd.f32 0.0, %v1521
        %v1523 = vpop.f32.mrb[0].mxu0
        %1524 = vmatprep.mubr.f32.mxu0 0.0
        %1525 = vmatmul.mubr.f32.gmra.mrb[0].mxu0 %v1440
        %v1526 = vpop.f32.mrb[0].mxu0
        %v1527 = vadd.f32 0.0, %v1526
        %v1528 = vpop.f32.mrb[0].mxu0
        %1529 = vmatprep.mubr.f32.mxu0 0.0
        %1530 = vmatmul.mubr.f32.gmra.mrb[0].mxu0 %v1441
        %v1531 = vpop.f32.mrb[0].mxu0
        %v1532 = vadd.f32 0.0, %v1531
        %v1533 = vpop.f32.mrb[0].mxu0
        %1534 = vmatprep.mubr.f32.mxu0 0.0
        %1535 = vmatmul.mubr.f32.gmra.mrb[0].mxu0 %v1442
        %v1536 = vpop.f32.mrb[0].mxu0
        %v1537 = vadd.f32 0.0, %v1536
        %v1538 = vpop.f32.mrb[0].mxu0
        %1539 = vmatprep.mubr.f32.mxu0 0.0
        %1540 = vmatmul.mubr.f32.gmra.mrb[0].mxu0 %v1443
        %v1541 = vpop.f32.mrb[0].mxu0
        %v1542 = vadd.f32 0.0, %v1541
        %v1543 = vpop.f32.mrb[0].mxu0
        %1544 = vmatprep.mubr.f32.mxu0 0.0
        %1545 = vmatmul.mubr.f32.gmra.mrb[0].mxu0 %v1444
        %v1546 = vpop.f32.mrb[0].mxu0
        %v1547 = vadd.f32 0.0, %v1546
        %v1548 = vpop.f32.mrb[0].mxu0
        %1549 = vmatprep.mubr.f32.mxu0 0.0
        %1550 = vmatmul.mubr.f32.gmra.mrb[0].mxu0 %v1445
        %v1551 = vpop.f32.mrb[0].mxu0
        %v1552 = vadd.f32 0.0, %v1551
        %v1553 = vpop.f32.mrb[0].mxu0
        %1554 = vmatprep.mubr.f32.mxu0 0.0
        %1555 = vmatmul.mubr.f32.gmra.mrb[0].mxu0 %v1446
        %v1556 = vpop.f32.mrb[0].mxu0
        %v1557 = vadd.f32 0.0, %v1556
        %v1558 = vpop.f32.mrb[0].mxu0
        %1559 = vmatprep.mubr.f32.mxu0 0.0
        %1560 = vmatmul.mubr.f32.gmra.mrb[0].mxu0 %v1447
        %v1561 = vpop.f32.mrb[0].mxu0
        %v1562 = vadd.f32 0.0, %v1561
        %v1563 = vpop.f32.mrb[0].mxu0
        %1564 = vmatprep.mubr.f32.mxu0 0.0
        %1565 = vmatmul.mubr.f32.gmra.mrb[0].mxu0 %v1448
        %v1566 = vpop.f32.mrb[0].mxu0
        %v1567 = vadd.f32 0.0, %v1566
        %v1568 = vpop.f32.mrb[0].mxu0
        %1569 = vmatprep.mubr.f32.mxu0 0.0
        %1570 = vmatmul.mubr.f32.gmra.mrb[0].mxu0 %v1449
        %v1571 = vpop.f32.mrb[0].mxu0
        %v1572 = vadd.f32 0.0, %v1571
        %v1573 = vpop.f32.mrb[0].mxu0
        %1574 = vmatprep.mubr.f32.mxu0 0.0
        %1575 = vmatmul.mubr.f32.gmra.mrb[0].mxu0 %v1450
        %v1576 = vpop.f32.mrb[0].mxu0
        %v1577 = vadd.f32 0.0, %v1576
        %v1578 = vpop.f32.mrb[0].mxu0
        %1579 = vmatprep.mubr.f32.mxu0 0.0
        %1580 = vmatmul.mubr.f32.gmra.mrb[0].mxu0 %v1451
        %v1581 = vpop.f32.mrb[0].mxu0
        %v1582 = vadd.f32 0.0, %v1581
        %v1583 = vpop.f32.mrb[0].mxu0
        %1584 = vmatprep.mubr.f32.mxu0 0.0
        %1585 = vmatmul.mubr.f32.gmra.mrb[0].mxu0 %v1452
        %v1586 = vpop.f32.mrb[0].mxu0
        %v1587 = vadd.f32 0.0, %v1586
        %v1588 = vpop.f32.mrb[0].mxu0
        %1589 = vmatprep.mubr.f32.mxu0 0.0
        %1590 = vmatmul.mubr.f32.gmra.mrb[0].mxu0 %v1453
        %v1591 = vpop.f32.mrb[0].mxu0
        %v1592 = vadd.f32 0.0, %v1591
        %v1593 = vpop.f32.mrb[0].mxu0
        %1594 = vmatprep.mubr.f32.mxu0 0.0
        %1595 = vmatmul.mubr.f32.gmra.mrb[0].mxu0 %v1454
        %v1596 = vpop.f32.mrb[0].mxu0
        %v1597 = vadd.f32 0.0, %v1596
        %v1598 = vpop.f32.mrb[0].mxu0
        %1599 = vdwg.mxu0
        %v1600 = vsub.f32 0.0, %v1522
        %v1601 = vsub.f32 0.0, %v1527
        %v1602 = vsub.f32 0.0, %v1532
        %v1603 = vsub.f32 0.0, %v1537
        %v1604 = vsub.f32 0.0, %v1542
        %v1605 = vsub.f32 0.0, %v1547
        %v1606 = vsub.f32 0.0, %v1552
        %v1607 = vsub.f32 0.0, %v1557
        %v1608 = vsub.f32 0.0, %v1562
        %v1609 = vsub.f32 0.0, %v1567
        %v1610 = vsub.f32 0.0, %v1572
        %v1611 = vsub.f32 0.0, %v1577
        %v1612 = vsub.f32 0.0, %v1582
        %v1613 = vsub.f32 0.0, %v1587
        %v1614 = vsub.f32 0.0, %v1592
        %v1615 = vsub.f32 0.0, %v1597
        %v1616 = vmul.f32 %v1600, 1.442695
        %v1617 = vpow.pop %v1616
        %v1618 = vmul.f32 %v1601, 1.442695
        %v1619 = vpow.pop %v1618
        %v1620 = vmul.f32 %v1602, 1.442695
        %v1621 = vpow.pop %v1620
        %v1622 = vmul.f32 %v1603, 1.442695
        %v1623 = vpow.pop %v1622
        %v1624 = vmul.f32 %v1604, 1.442695
        %v1625 = vpow.pop %v1624
        %v1626 = vmul.f32 %v1605, 1.442695
        %v1627 = vpow.pop %v1626
        %v1628 = vmul.f32 %v1606, 1.442695
        %v1629 = vpow.pop %v1628
        %v1630 = vmul.f32 %v1607, 1.442695
        %v1631 = vpow.pop %v1630
        %v1632 = vmul.f32 %v1608, 1.442695
        %v1633 = vpow.pop %v1632
        %v1634 = vmul.f32 %v1609, 1.442695
        %v1635 = vpow.pop %v1634
        %v1636 = vmul.f32 %v1610, 1.442695
        %v1637 = vpow.pop %v1636
        %v1638 = vmul.f32 %v1611, 1.442695
        %v1639 = vpow.pop %v1638
        %v1640 = vmul.f32 %v1612, 1.442695
        %v1641 = vpow.pop %v1640
        %v1642 = vmul.f32 %v1613, 1.442695
        %v1643 = vpow.pop %v1642
        %v1644 = vmul.f32 %v1614, 1.442695
        %v1645 = vpow.pop %v1644
        %v1646 = vmul.f32 %v1615, 1.442695
        %v1647 = vpow.pop %v1646
        %v1648 = vadd.f32 %v1617, 1.0
        %v1649 = vadd.f32 %v1619, 1.0
        %v1650 = vadd.f32 %v1621, 1.0
        %v1651 = vadd.f32 %v1623, 1.0
        %v1652 = vadd.f32 %v1625, 1.0
        %v1653 = vadd.f32 %v1627, 1.0
        %v1654 = vadd.f32 %v1629, 1.0
        %v1655 = vadd.f32 %v1631, 1.0
        %v1656 = vadd.f32 %v1633, 1.0
        %v1657 = vadd.f32 %v1635, 1.0
        %v1658 = vadd.f32 %v1637, 1.0
        %v1659 = vadd.f32 %v1639, 1.0
        %v1660 = vadd.f32 %v1641, 1.0
        %v1661 = vadd.f32 %v1643, 1.0
        %v1662 = vadd.f32 %v1645, 1.0
        %v1663 = vadd.f32 %v1647, 1.0
        %v1664 = vrcp.pop %v1648
        %v1665 = vmul.f32 1.0, %v1664
        %v1666 = vrcp.pop %v1649
        %v1667 = vmul.f32 1.0, %v1666
        %v1668 = vrcp.pop %v1650
        %v1669 = vmul.f32 1.0, %v1668
        %v1670 = vrcp.pop %v1651
        %v1671 = vmul.f32 1.0, %v1670
        %v1672 = vrcp.pop %v1652
        %v1673 = vmul.f32 1.0, %v1672
        %v1674 = vrcp.pop %v1653
        %v1675 = vmul.f32 1.0, %v1674
        %v1676 = vrcp.pop %v1654
        %v1677 = vmul.f32 1.0, %v1676
        %v1678 = vrcp.pop %v1655
        %v1679 = vmul.f32 1.0, %v1678
        %v1680 = vrcp.pop %v1656
        %v1681 = vmul.f32 1.0, %v1680
        %v1682 = vrcp.pop %v1657
        %v1683 = vmul.f32 1.0, %v1682
        %v1684 = vrcp.pop %v1658
        %v1685 = vmul.f32 1.0, %v1684
        %v1686 = vrcp.pop %v1659
        %v1687 = vmul.f32 1.0, %v1686
        %v1688 = vrcp.pop %v1660
        %v1689 = vmul.f32 1.0, %v1688
        %v1690 = vrcp.pop %v1661
        %v1691 = vmul.f32 1.0, %v1690
        %v1692 = vrcp.pop %v1662
        %v1693 = vmul.f32 1.0, %v1692
        %v1694 = vrcp.pop %v1663
        %v1695 = vmul.f32 1.0, %v1694
        %1697 = vset.pattern.permute.xlu0 0
        %1698 = vperm.xlu0 %1697, %v1665
        %v1699 = vpop.permute.xlu0 %1698
        %1702 = vset.pattern.permute.xlu0 0
        %1703 = vperm.xlu0 %1702, %v1667
        %v1704 = vpop.permute.xlu0 %1703
        %1707 = vset.pattern.permute.xlu0 0
        %1708 = vperm.xlu0 %1707, %v1669
        %v1709 = vpop.permute.xlu0 %1708
        %1712 = vset.pattern.permute.xlu0 0
        %1713 = vperm.xlu0 %1712, %v1671
        %v1714 = vpop.permute.xlu0 %1713
        %1717 = vset.pattern.permute.xlu0 0
        %1718 = vperm.xlu0 %1717, %v1673
        %v1719 = vpop.permute.xlu0 %1718
        %1722 = vset.pattern.permute.xlu0 0
        %1723 = vperm.xlu0 %1722, %v1675
        %v1724 = vpop.permute.xlu0 %1723
        %1727 = vset.pattern.permute.xlu0 0
        %1728 = vperm.xlu0 %1727, %v1677
        %v1729 = vpop.permute.xlu0 %1728
        %1732 = vset.pattern.permute.xlu0 0
        %1733 = vperm.xlu0 %1732, %v1679
        %v1734 = vpop.permute.xlu0 %1733
        %1737 = vset.pattern.permute.xlu0 0
        %1738 = vperm.xlu0 %1737, %v1681
        %v1739 = vpop.permute.xlu0 %1738
        %1742 = vset.pattern.permute.xlu0 0
        %1743 = vperm.xlu0 %1742, %v1683
        %v1744 = vpop.permute.xlu0 %1743
        %1747 = vset.pattern.permute.xlu0 0
        %1748 = vperm.xlu0 %1747, %v1685
        %v1749 = vpop.permute.xlu0 %1748
        %1752 = vset.pattern.permute.xlu0 0
        %1753 = vperm.xlu0 %1752, %v1687
        %v1754 = vpop.permute.xlu0 %1753
        %1757 = vset.pattern.permute.xlu0 0
        %1758 = vperm.xlu0 %1757, %v1689
        %v1759 = vpop.permute.xlu0 %1758
        %1762 = vset.pattern.permute.xlu0 0
        %1763 = vperm.xlu0 %1762, %v1691
        %v1764 = vpop.permute.xlu0 %1763
        %1767 = vset.pattern.permute.xlu0 0
        %1768 = vperm.xlu0 %1767, %v1693
        %v1769 = vpop.permute.xlu0 %1768
        %1772 = vset.pattern.permute.xlu0 0
        %1773 = vperm.xlu0 %1772, %v1695
        %v1774 = vpop.permute.xlu0 %1773
        %v1776 = vmul.f32 %v1343, %v1699
        %v1777 = vmul.f32 %v1344, %v1699
        %v1778 = vmul.f32 %v1345, %v1704
        %v1779 = vmul.f32 %v1346, %v1704
        %v1780 = vmul.f32 %v1347, %v1709
        %v1781 = vmul.f32 %v1348, %v1709
        %v1782 = vmul.f32 %v1349, %v1714
        %v1783 = vmul.f32 %v1350, %v1714
        %v1784 = vmul.f32 %v1351, %v1719
        %v1785 = vmul.f32 %v1352, %v1719
        %v1786 = vmul.f32 %v1353, %v1724
        %v1787 = vmul.f32 %v1354, %v1724
        %v1788 = vmul.f32 %v1355, %v1729
        %v1789 = vmul.f32 %v1356, %v1729
        %v1790 = vmul.f32 %v1357, %v1734
        %v1791 = vmul.f32 %v1358, %v1734
        %v1792 = vmul.f32 %v1359, %v1739
        %v1793 = vmul.f32 %v1360, %v1739
        %v1794 = vmul.f32 %v1361, %v1744
        %v1795 = vmul.f32 %v1362, %v1744
        %v1796 = vmul.f32 %v1363, %v1749
        %v1797 = vmul.f32 %v1364, %v1749
        %v1798 = vmul.f32 %v1365, %v1754
        %v1799 = vmul.f32 %v1366, %v1754
        %v1800 = vmul.f32 %v1367, %v1759
        %v1801 = vmul.f32 %v1368, %v1759
        %v1802 = vmul.f32 %v1369, %v1764
        %v1803 = vmul.f32 %v1370, %v1764
        %v1804 = vmul.f32 %v1371, %v1769
        %v1805 = vmul.f32 %v1372, %v1769
        %v1806 = vmul.f32 %v1373, %v1774
        %v1807 = vmul.f32 %v1374, %v1774
        %s1808 = scalar_lea.vmem %s174, 512 [#allocation8]
        %1809 = vst [vmem:[%s1808] sm:$0xff] %v1776
        %1810 = vst [vmem:[%s1808 + $0x8] sm:$0xff] %v1777
        %1811 = vst [vmem:[%s1808 + $0x10] sm:$0xff] %v1778
        %1812 = vst [vmem:[%s1808 + $0x18] sm:$0xff] %v1779
        %1813 = vst [vmem:[%s1808 + $0x20] sm:$0xff] %v1780
        %1814 = vst [vmem:[%s1808 + $0x28] sm:$0xff] %v1781
        %1815 = vst [vmem:[%s1808 + $0x30] sm:$0xff] %v1782
        %1816 = vst [vmem:[%s1808 + $0x38] sm:$0xff] %v1783
        %1817 = vst [vmem:[%s1808 + $0x40] sm:$0xff] %v1784
        %1818 = vst [vmem:[%s1808 + $0x48] sm:$0xff] %v1785
        %1819 = vst [vmem:[%s1808 + $0x50] sm:$0xff] %v1786
        %1820 = vst [vmem:[%s1808 + $0x58] sm:$0xff] %v1787
        %1821 = vst [vmem:[%s1808 + $0x60] sm:$0xff] %v1788
        %1822 = vst [vmem:[%s1808 + $0x68] sm:$0xff] %v1789
        %1823 = vst [vmem:[%s1808 + $0x70] sm:$0xff] %v1790
        %1824 = vst [vmem:[%s1808 + $0x78] sm:$0xff] %v1791
        %1825 = vst [vmem:[%s1808 + $0x80] sm:$0xff] %v1792
        %1826 = vst [vmem:[%s1808 + $0x88] sm:$0xff] %v1793
        %1827 = vst [vmem:[%s1808 + $0x90] sm:$0xff] %v1794
        %1828 = vst [vmem:[%s1808 + $0x98] sm:$0xff] %v1795
        %1829 = vst [vmem:[%s1808 + $0xa0] sm:$0xff] %v1796
        %1830 = vst [vmem:[%s1808 + $0xa8] sm:$0xff] %v1797
        %1831 = vst [vmem:[%s1808 + $0xb0] sm:$0xff] %v1798
        %1832 = vst [vmem:[%s1808 + $0xb8] sm:$0xff] %v1799
        %1833 = vst [vmem:[%s1808 + $0xc0] sm:$0xff] %v1800
        %1834 = vst [vmem:[%s1808 + $0xc8] sm:$0xff] %v1801
        %1835 = vst [vmem:[%s1808 + $0xd0] sm:$0xff] %v1802
        %1836 = vst [vmem:[%s1808 + $0xd8] sm:$0xff] %v1803
        %1837 = vst [vmem:[%s1808 + $0xe0] sm:$0xff] %v1804
        %1838 = vst [vmem:[%s1808 + $0xe8] sm:$0xff] %v1805
        %1839 = vst [vmem:[%s1808 + $0xf0] sm:$0xff] %v1806
        %1840 = vst [vmem:[%s1808 + $0xf8] sm:$0xff] %v1807
        %s1841 = scalar_lea.vmem %s153, 768 [#allocation7]
        %v1842 = vld [vmem:[%s1841] sm:$0xff]
        %v1843 = vld [vmem:[%s1841 + $0x8] sm:$0xff]
        %v1844 = vld [vmem:[%s1841 + $0x10] sm:$0xff]
        %v1845 = vld [vmem:[%s1841 + $0x18] sm:$0xff]
        %v1846 = vld [vmem:[%s1841 + $0x20] sm:$0xff]
        %v1847 = vld [vmem:[%s1841 + $0x28] sm:$0xff]
        %v1848 = vld [vmem:[%s1841 + $0x30] sm:$0xff]
        %v1849 = vld [vmem:[%s1841 + $0x38] sm:$0xff]
        %v1850 = vld [vmem:[%s1841 + $0x40] sm:$0xff]
        %v1851 = vld [vmem:[%s1841 + $0x48] sm:$0xff]
        %v1852 = vld [vmem:[%s1841 + $0x50] sm:$0xff]
        %v1853 = vld [vmem:[%s1841 + $0x58] sm:$0xff]
        %v1854 = vld [vmem:[%s1841 + $0x60] sm:$0xff]
        %v1855 = vld [vmem:[%s1841 + $0x68] sm:$0xff]
        %v1856 = vld [vmem:[%s1841 + $0x70] sm:$0xff]
        %v1857 = vld [vmem:[%s1841 + $0x78] sm:$0xff]
        %v1858 = vld [vmem:[%s1841 + $0x80] sm:$0xff]
        %v1859 = vld [vmem:[%s1841 + $0x88] sm:$0xff]
        %v1860 = vld [vmem:[%s1841 + $0x90] sm:$0xff]
        %v1861 = vld [vmem:[%s1841 + $0x98] sm:$0xff]
        %v1862 = vld [vmem:[%s1841 + $0xa0] sm:$0xff]
        %v1863 = vld [vmem:[%s1841 + $0xa8] sm:$0xff]
        %v1864 = vld [vmem:[%s1841 + $0xb0] sm:$0xff]
        %v1865 = vld [vmem:[%s1841 + $0xb8] sm:$0xff]
        %v1866 = vld [vmem:[%s1841 + $0xc0] sm:$0xff]
        %v1867 = vld [vmem:[%s1841 + $0xc8] sm:$0xff]
        %v1868 = vld [vmem:[%s1841 + $0xd0] sm:$0xff]
        %v1869 = vld [vmem:[%s1841 + $0xd8] sm:$0xff]
        %v1870 = vld [vmem:[%s1841 + $0xe0] sm:$0xff]
        %v1871 = vld [vmem:[%s1841 + $0xe8] sm:$0xff]
        %v1872 = vld [vmem:[%s1841 + $0xf0] sm:$0xff]
        %v1873 = vld [vmem:[%s1841 + $0xf8] sm:$0xff]
        %v1874 = vadd.f32 %v1842, %v1843
        %1875 = vadd.xlane.f32.xlu0 %v1874
        %v1876 = vpop.xlane.xlu0 %1875
        %v1877 = vadd.f32 %v1844, %v1845
        %1878 = vadd.xlane.f32.xlu0 %v1877
        %v1879 = vpop.xlane.xlu0 %1878
        %v1880 = vadd.f32 %v1846, %v1847
        %1881 = vadd.xlane.f32.xlu0 %v1880
        %v1882 = vpop.xlane.xlu0 %1881
        %v1883 = vadd.f32 %v1848, %v1849
        %1884 = vadd.xlane.f32.xlu0 %v1883
        %v1885 = vpop.xlane.xlu0 %1884
        %v1886 = vadd.f32 %v1850, %v1851
        %1887 = vadd.xlane.f32.xlu0 %v1886
        %v1888 = vpop.xlane.xlu0 %1887
        %v1889 = vadd.f32 %v1852, %v1853
        %1890 = vadd.xlane.f32.xlu0 %v1889
        %v1891 = vpop.xlane.xlu0 %1890
        %v1892 = vadd.f32 %v1854, %v1855
        %1893 = vadd.xlane.f32.xlu0 %v1892
        %v1894 = vpop.xlane.xlu0 %1893
        %v1895 = vadd.f32 %v1856, %v1857
        %1896 = vadd.xlane.f32.xlu0 %v1895
        %v1897 = vpop.xlane.xlu0 %1896
        %v1898 = vadd.f32 %v1858, %v1859
        %1899 = vadd.xlane.f32.xlu0 %v1898
        %v1900 = vpop.xlane.xlu0 %1899
        %v1901 = vadd.f32 %v1860, %v1861
        %1902 = vadd.xlane.f32.xlu0 %v1901
        %v1903 = vpop.xlane.xlu0 %1902
        %v1904 = vadd.f32 %v1862, %v1863
        %1905 = vadd.xlane.f32.xlu0 %v1904
        %v1906 = vpop.xlane.xlu0 %1905
        %v1907 = vadd.f32 %v1864, %v1865
        %1908 = vadd.xlane.f32.xlu0 %v1907
        %v1909 = vpop.xlane.xlu0 %1908
        %v1910 = vadd.f32 %v1866, %v1867
        %1911 = vadd.xlane.f32.xlu0 %v1910
        %v1912 = vpop.xlane.xlu0 %1911
        %v1913 = vadd.f32 %v1868, %v1869
        %1914 = vadd.xlane.f32.xlu0 %v1913
        %v1915 = vpop.xlane.xlu0 %1914
        %v1916 = vadd.f32 %v1870, %v1871
        %1917 = vadd.xlane.f32.xlu0 %v1916
        %v1918 = vpop.xlane.xlu0 %1917
        %v1919 = vadd.f32 %v1872, %v1873
        %1920 = vadd.xlane.f32.xlu0 %v1919
        %v1921 = vpop.xlane.xlu0 %1920
        %v1922 = vmul.f32 %v1876, 0.00390625
        %v1923 = vmul.f32 %v1879, 0.00390625
        %v1924 = vmul.f32 %v1882, 0.00390625
        %v1925 = vmul.f32 %v1885, 0.00390625
        %v1926 = vmul.f32 %v1888, 0.00390625
        %v1927 = vmul.f32 %v1891, 0.00390625
        %v1928 = vmul.f32 %v1894, 0.00390625
        %v1929 = vmul.f32 %v1897, 0.00390625
        %v1930 = vmul.f32 %v1900, 0.00390625
        %v1931 = vmul.f32 %v1903, 0.00390625
        %v1932 = vmul.f32 %v1906, 0.00390625
        %v1933 = vmul.f32 %v1909, 0.00390625
        %v1934 = vmul.f32 %v1912, 0.00390625
        %v1935 = vmul.f32 %v1915, 0.00390625
        %v1936 = vmul.f32 %v1918, 0.00390625
        %v1937 = vmul.f32 %v1921, 0.00390625
        %v1938 = vld [vmem:[#allocation2] sm:$0xff]
        %v1939 = vld [vmem:[#allocation2 + $0x8] sm:$0xff]
        %v1940 = vld [vmem:[#allocation2 + $0x10] sm:$0xff]
        %v1941 = vld [vmem:[#allocation2 + $0x18] sm:$0xff]
        %v1942 = vld [vmem:[#allocation2 + $0x20] sm:$0xff]
        %v1943 = vld [vmem:[#allocation2 + $0x28] sm:$0xff]
        %v1944 = vld [vmem:[#allocation2 + $0x30] sm:$0xff]
        %v1945 = vld [vmem:[#allocation2 + $0x38] sm:$0xff]
        %v1946 = vld [vmem:[#allocation2 + $0x40] sm:$0xff]
        %v1947 = vld [vmem:[#allocation2 + $0x48] sm:$0xff]
        %v1948 = vld [vmem:[#allocation2 + $0x50] sm:$0xff]
        %v1949 = vld [vmem:[#allocation2 + $0x58] sm:$0xff]
        %v1950 = vld [vmem:[#allocation2 + $0x60] sm:$0xff]
        %v1951 = vld [vmem:[#allocation2 + $0x68] sm:$0xff]
        %v1952 = vld [vmem:[#allocation2 + $0x70] sm:$0xff]
        %v1953 = vld [vmem:[#allocation2 + $0x78] sm:$0xff]
        %1954 = vmatprep.subr.mxu0 0.0
        %1955 = vmatpush1.msra.mxu0 %v1922
        %1956 = vmatprep.subr.mxu0 0.0
        %1957 = vmatpush1.msra.mxu0 %v1923
        %1958 = vmatprep.subr.mxu0 0.0
        %1959 = vmatpush1.msra.mxu0 %v1924
        %1960 = vmatprep.subr.mxu0 0.0
        %1961 = vmatpush1.msra.mxu0 %v1925
        %1962 = vmatprep.subr.mxu0 0.0
        %1963 = vmatpush1.msra.mxu0 %v1926
        %1964 = vmatprep.subr.mxu0 0.0
        %1965 = vmatpush1.msra.mxu0 %v1927
        %1966 = vmatprep.subr.mxu0 0.0
        %1967 = vmatpush1.msra.mxu0 %v1928
        %1968 = vmatprep.subr.mxu0 0.0
        %1969 = vmatpush1.msra.mxu0 %v1929
        %1970 = vmatprep.subr.mxu0 0.0
        %1971 = vmatpush1.msra.mxu0 %v1930
        %1972 = vmatprep.subr.mxu0 0.0
        %1973 = vmatpush1.msra.mxu0 %v1931
        %1974 = vmatprep.subr.mxu0 0.0
        %1975 = vmatpush1.msra.mxu0 %v1932
        %1976 = vmatprep.subr.mxu0 0.0
        %1977 = vmatpush1.msra.mxu0 %v1933
        %1978 = vmatprep.subr.mxu0 0.0
        %1979 = vmatpush1.msra.mxu0 %v1934
        %1980 = vmatprep.subr.mxu0 0.0
        %1981 = vmatpush1.msra.mxu0 %v1935
        %1982 = vmatprep.subr.mxu0 0.0
        %1983 = vmatpush1.msra.mxu0 %v1936
        %1984 = vmatprep.subr.mxu0 0.0
        %1985 = vmatpush1.msra.mxu0 %v1937
        %1986 = vmatprep.subr.mxu0 0.0
        %1987 = vmatpush1.msra.mxu0 0.0
        %1988 = vmatprep.subr.mxu0 0.0
        %1989 = vmatpush1.msra.mxu0 0.0
        %1990 = vmatprep.subr.mxu0 0.0
        %1991 = vmatpush1.msra.mxu0 0.0
        %1992 = vmatprep.subr.mxu0 0.0
        %1993 = vmatpush1.msra.mxu0 0.0
        %1994 = vmatprep.subr.mxu0 0.0
        %1995 = vmatpush1.msra.mxu0 0.0
        %1996 = vmatprep.subr.mxu0 0.0
        %1997 = vmatpush1.msra.mxu0 0.0
        %1998 = vmatprep.subr.mxu0 0.0
        %1999 = vmatpush1.msra.mxu0 0.0
        %2000 = vmatprep.subr.mxu0 0.0
        %2001 = vmatpush1.msra.mxu0 0.0
        %2002 = vmatprep.subr.mxu0 0.0
        %2003 = vmatpush1.msra.mxu0 0.0
        %2004 = vmatprep.subr.mxu0 0.0
        %2005 = vmatpush1.msra.mxu0 0.0
        %2006 = vmatprep.subr.mxu0 0.0
        %2007 = vmatpush1.msra.mxu0 0.0
        %2008 = vmatprep.subr.mxu0 0.0
        %2009 = vmatpush1.msra.mxu0 0.0
        %2010 = vmatprep.subr.mxu0 0.0
        %2011 = vmatpush1.msra.mxu0 0.0
        %2012 = vmatprep.subr.mxu0 0.0
        %2013 = vmatpush1.msra.mxu0 0.0
        %2014 = vmatprep.subr.mxu0 0.0
        %2015 = vmatpush1.msra.mxu0 0.0
        %2016 = vmatprep.subr.mxu0 0.0
        %2017 = vmatpush1.msra.mxu0 0.0
        %2018 = vmatprep.mubr.f32.mxu0 0.0
        %2019 = vmatmul.mubr.f32.gmra.mrb[0].mxu0 %v1938
        %v2020 = vpop.f32.mrb[0].mxu0
        %v2021 = vadd.f32 0.0, %v2020
        %v2022 = vpop.f32.mrb[0].mxu0
        %2023 = vmatprep.mubr.f32.mxu0 0.0
        %2024 = vmatmul.mubr.f32.gmra.mrb[0].mxu0 %v1939
        %v2025 = vpop.f32.mrb[0].mxu0
        %v2026 = vadd.f32 0.0, %v2025
        %v2027 = vpop.f32.mrb[0].mxu0
        %2028 = vmatprep.mubr.f32.mxu0 0.0
        %2029 = vmatmul.mubr.f32.gmra.mrb[0].mxu0 %v1940
        %v2030 = vpop.f32.mrb[0].mxu0
        %v2031 = vadd.f32 0.0, %v2030
        %v2032 = vpop.f32.mrb[0].mxu0
        %2033 = vmatprep.mubr.f32.mxu0 0.0
        %2034 = vmatmul.mubr.f32.gmra.mrb[0].mxu0 %v1941
        %v2035 = vpop.f32.mrb[0].mxu0
        %v2036 = vadd.f32 0.0, %v2035
        %v2037 = vpop.f32.mrb[0].mxu0
        %2038 = vmatprep.mubr.f32.mxu0 0.0
        %2039 = vmatmul.mubr.f32.gmra.mrb[0].mxu0 %v1942
        %v2040 = vpop.f32.mrb[0].mxu0
        %v2041 = vadd.f32 0.0, %v2040
        %v2042 = vpop.f32.mrb[0].mxu0
        %2043 = vmatprep.mubr.f32.mxu0 0.0
        %2044 = vmatmul.mubr.f32.gmra.mrb[0].mxu0 %v1943
        %v2045 = vpop.f32.mrb[0].mxu0
        %v2046 = vadd.f32 0.0, %v2045
        %v2047 = vpop.f32.mrb[0].mxu0
        %2048 = vmatprep.mubr.f32.mxu0 0.0
        %2049 = vmatmul.mubr.f32.gmra.mrb[0].mxu0 %v1944
        %v2050 = vpop.f32.mrb[0].mxu0
        %v2051 = vadd.f32 0.0, %v2050
        %v2052 = vpop.f32.mrb[0].mxu0
        %2053 = vmatprep.mubr.f32.mxu0 0.0
        %2054 = vmatmul.mubr.f32.gmra.mrb[0].mxu0 %v1945
        %v2055 = vpop.f32.mrb[0].mxu0
        %v2056 = vadd.f32 0.0, %v2055
        %v2057 = vpop.f32.mrb[0].mxu0
        %2058 = vmatprep.mubr.f32.mxu0 0.0
        %2059 = vmatmul.mubr.f32.gmra.mrb[0].mxu0 %v1946
        %v2060 = vpop.f32.mrb[0].mxu0
        %v2061 = vadd.f32 0.0, %v2060
        %v2062 = vpop.f32.mrb[0].mxu0
        %2063 = vmatprep.mubr.f32.mxu0 0.0
        %2064 = vmatmul.mubr.f32.gmra.mrb[0].mxu0 %v1947
        %v2065 = vpop.f32.mrb[0].mxu0
        %v2066 = vadd.f32 0.0, %v2065
        %v2067 = vpop.f32.mrb[0].mxu0
        %2068 = vmatprep.mubr.f32.mxu0 0.0
        %2069 = vmatmul.mubr.f32.gmra.mrb[0].mxu0 %v1948
        %v2070 = vpop.f32.mrb[0].mxu0
        %v2071 = vadd.f32 0.0, %v2070
        %v2072 = vpop.f32.mrb[0].mxu0
        %2073 = vmatprep.mubr.f32.mxu0 0.0
        %2074 = vmatmul.mubr.f32.gmra.mrb[0].mxu0 %v1949
        %v2075 = vpop.f32.mrb[0].mxu0
        %v2076 = vadd.f32 0.0, %v2075
        %v2077 = vpop.f32.mrb[0].mxu0
        %2078 = vmatprep.mubr.f32.mxu0 0.0
        %2079 = vmatmul.mubr.f32.gmra.mrb[0].mxu0 %v1950
        %v2080 = vpop.f32.mrb[0].mxu0
        %v2081 = vadd.f32 0.0, %v2080
        %v2082 = vpop.f32.mrb[0].mxu0
        %2083 = vmatprep.mubr.f32.mxu0 0.0
        %2084 = vmatmul.mubr.f32.gmra.mrb[0].mxu0 %v1951
        %v2085 = vpop.f32.mrb[0].mxu0
        %v2086 = vadd.f32 0.0, %v2085
        %v2087 = vpop.f32.mrb[0].mxu0
        %2088 = vmatprep.mubr.f32.mxu0 0.0
        %2089 = vmatmul.mubr.f32.gmra.mrb[0].mxu0 %v1952
        %v2090 = vpop.f32.mrb[0].mxu0
        %v2091 = vadd.f32 0.0, %v2090
        %v2092 = vpop.f32.mrb[0].mxu0
        %2093 = vmatprep.mubr.f32.mxu0 0.0
        %2094 = vmatmul.mubr.f32.gmra.mrb[0].mxu0 %v1953
        %v2095 = vpop.f32.mrb[0].mxu0
        %v2096 = vadd.f32 0.0, %v2095
        %v2097 = vpop.f32.mrb[0].mxu0
        %2098 = vdwg.mxu0
        %v2099 = vsub.f32 0.0, %v2021
        %v2100 = vsub.f32 0.0, %v2026
        %v2101 = vsub.f32 0.0, %v2031
        %v2102 = vsub.f32 0.0, %v2036
        %v2103 = vsub.f32 0.0, %v2041
        %v2104 = vsub.f32 0.0, %v2046
        %v2105 = vsub.f32 0.0, %v2051
        %v2106 = vsub.f32 0.0, %v2056
        %v2107 = vsub.f32 0.0, %v2061
        %v2108 = vsub.f32 0.0, %v2066
        %v2109 = vsub.f32 0.0, %v2071
        %v2110 = vsub.f32 0.0, %v2076
        %v2111 = vsub.f32 0.0, %v2081
        %v2112 = vsub.f32 0.0, %v2086
        %v2113 = vsub.f32 0.0, %v2091
        %v2114 = vsub.f32 0.0, %v2096
        %v2115 = vmul.f32 %v2099, 1.442695
        %v2116 = vpow.pop %v2115
        %v2117 = vmul.f32 %v2100, 1.442695
        %v2118 = vpow.pop %v2117
        %v2119 = vmul.f32 %v2101, 1.442695
        %v2120 = vpow.pop %v2119
        %v2121 = vmul.f32 %v2102, 1.442695
        %v2122 = vpow.pop %v2121
        %v2123 = vmul.f32 %v2103, 1.442695
        %v2124 = vpow.pop %v2123
        %v2125 = vmul.f32 %v2104, 1.442695
        %v2126 = vpow.pop %v2125
        %v2127 = vmul.f32 %v2105, 1.442695
        %v2128 = vpow.pop %v2127
        %v2129 = vmul.f32 %v2106, 1.442695
        %v2130 = vpow.pop %v2129
        %v2131 = vmul.f32 %v2107, 1.442695
        %v2132 = vpow.pop %v2131
        %v2133 = vmul.f32 %v2108, 1.442695
        %v2134 = vpow.pop %v2133
        %v2135 = vmul.f32 %v2109, 1.442695
        %v2136 = vpow.pop %v2135
        %v2137 = vmul.f32 %v2110, 1.442695
        %v2138 = vpow.pop %v2137
        %v2139 = vmul.f32 %v2111, 1.442695
        %v2140 = vpow.pop %v2139
        %v2141 = vmul.f32 %v2112, 1.442695
        %v2142 = vpow.pop %v2141
        %v2143 = vmul.f32 %v2113, 1.442695
        %v2144 = vpow.pop %v2143
        %v2145 = vmul.f32 %v2114, 1.442695
        %v2146 = vpow.pop %v2145
        %v2147 = vadd.f32 %v2116, 1.0
        %v2148 = vadd.f32 %v2118, 1.0
        %v2149 = vadd.f32 %v2120, 1.0
        %v2150 = vadd.f32 %v2122, 1.0
        %v2151 = vadd.f32 %v2124, 1.0
        %v2152 = vadd.f32 %v2126, 1.0
        %v2153 = vadd.f32 %v2128, 1.0
        %v2154 = vadd.f32 %v2130, 1.0
        %v2155 = vadd.f32 %v2132, 1.0
        %v2156 = vadd.f32 %v2134, 1.0
        %v2157 = vadd.f32 %v2136, 1.0
        %v2158 = vadd.f32 %v2138, 1.0
        %v2159 = vadd.f32 %v2140, 1.0
        %v2160 = vadd.f32 %v2142, 1.0
        %v2161 = vadd.f32 %v2144, 1.0
        %v2162 = vadd.f32 %v2146, 1.0
        %v2163 = vrcp.pop %v2147
        %v2164 = vmul.f32 1.0, %v2163
        %v2165 = vrcp.pop %v2148
        %v2166 = vmul.f32 1.0, %v2165
        %v2167 = vrcp.pop %v2149
        %v2168 = vmul.f32 1.0, %v2167
        %v2169 = vrcp.pop %v2150
        %v2170 = vmul.f32 1.0, %v2169
        %v2171 = vrcp.pop %v2151
        %v2172 = vmul.f32 1.0, %v2171
        %v2173 = vrcp.pop %v2152
        %v2174 = vmul.f32 1.0, %v2173
        %v2175 = vrcp.pop %v2153
        %v2176 = vmul.f32 1.0, %v2175
        %v2177 = vrcp.pop %v2154
        %v2178 = vmul.f32 1.0, %v2177
        %v2179 = vrcp.pop %v2155
        %v2180 = vmul.f32 1.0, %v2179
        %v2181 = vrcp.pop %v2156
        %v2182 = vmul.f32 1.0, %v2181
        %v2183 = vrcp.pop %v2157
        %v2184 = vmul.f32 1.0, %v2183
        %v2185 = vrcp.pop %v2158
        %v2186 = vmul.f32 1.0, %v2185
        %v2187 = vrcp.pop %v2159
        %v2188 = vmul.f32 1.0, %v2187
        %v2189 = vrcp.pop %v2160
        %v2190 = vmul.f32 1.0, %v2189
        %v2191 = vrcp.pop %v2161
        %v2192 = vmul.f32 1.0, %v2191
        %v2193 = vrcp.pop %v2162
        %v2194 = vmul.f32 1.0, %v2193
        %2196 = vset.pattern.permute.xlu0 0
        %2197 = vperm.xlu0 %2196, %v2164
        %v2198 = vpop.permute.xlu0 %2197
        %2201 = vset.pattern.permute.xlu0 0
        %2202 = vperm.xlu0 %2201, %v2166
        %v2203 = vpop.permute.xlu0 %2202
        %2206 = vset.pattern.permute.xlu0 0
        %2207 = vperm.xlu0 %2206, %v2168
        %v2208 = vpop.permute.xlu0 %2207
        %2211 = vset.pattern.permute.xlu0 0
        %2212 = vperm.xlu0 %2211, %v2170
        %v2213 = vpop.permute.xlu0 %2212
        %2216 = vset.pattern.permute.xlu0 0
        %2217 = vperm.xlu0 %2216, %v2172
        %v2218 = vpop.permute.xlu0 %2217
        %2221 = vset.pattern.permute.xlu0 0
        %2222 = vperm.xlu0 %2221, %v2174
        %v2223 = vpop.permute.xlu0 %2222
        %2226 = vset.pattern.permute.xlu0 0
        %2227 = vperm.xlu0 %2226, %v2176
        %v2228 = vpop.permute.xlu0 %2227
        %2231 = vset.pattern.permute.xlu0 0
        %2232 = vperm.xlu0 %2231, %v2178
        %v2233 = vpop.permute.xlu0 %2232
        %2236 = vset.pattern.permute.xlu0 0
        %2237 = vperm.xlu0 %2236, %v2180
        %v2238 = vpop.permute.xlu0 %2237
        %2241 = vset.pattern.permute.xlu0 0
        %2242 = vperm.xlu0 %2241, %v2182
        %v2243 = vpop.permute.xlu0 %2242
        %2246 = vset.pattern.permute.xlu0 0
        %2247 = vperm.xlu0 %2246, %v2184
        %v2248 = vpop.permute.xlu0 %2247
        %2251 = vset.pattern.permute.xlu0 0
        %2252 = vperm.xlu0 %2251, %v2186
        %v2253 = vpop.permute.xlu0 %2252
        %2256 = vset.pattern.permute.xlu0 0
        %2257 = vperm.xlu0 %2256, %v2188
        %v2258 = vpop.permute.xlu0 %2257
        %2261 = vset.pattern.permute.xlu0 0
        %2262 = vperm.xlu0 %2261, %v2190
        %v2263 = vpop.permute.xlu0 %2262
        %2266 = vset.pattern.permute.xlu0 0
        %2267 = vperm.xlu0 %2266, %v2192
        %v2268 = vpop.permute.xlu0 %2267
        %2271 = vset.pattern.permute.xlu0 0
        %2272 = vperm.xlu0 %2271, %v2194
        %v2273 = vpop.permute.xlu0 %2272
        %v2275 = vmul.f32 %v1842, %v2198
        %v2276 = vmul.f32 %v1843, %v2198
        %v2277 = vmul.f32 %v1844, %v2203
        %v2278 = vmul.f32 %v1845, %v2203
        %v2279 = vmul.f32 %v1846, %v2208
        %v2280 = vmul.f32 %v1847, %v2208
        %v2281 = vmul.f32 %v1848, %v2213
        %v2282 = vmul.f32 %v1849, %v2213
        %v2283 = vmul.f32 %v1850, %v2218
        %v2284 = vmul.f32 %v1851, %v2218
        %v2285 = vmul.f32 %v1852, %v2223
        %v2286 = vmul.f32 %v1853, %v2223
        %v2287 = vmul.f32 %v1854, %v2228
        %v2288 = vmul.f32 %v1855, %v2228
        %v2289 = vmul.f32 %v1856, %v2233
        %v2290 = vmul.f32 %v1857, %v2233
        %v2291 = vmul.f32 %v1858, %v2238
        %v2292 = vmul.f32 %v1859, %v2238
        %v2293 = vmul.f32 %v1860, %v2243
        %v2294 = vmul.f32 %v1861, %v2243
        %v2295 = vmul.f32 %v1862, %v2248
        %v2296 = vmul.f32 %v1863, %v2248
        %v2297 = vmul.f32 %v1864, %v2253
        %v2298 = vmul.f32 %v1865, %v2253
        %v2299 = vmul.f32 %v1866, %v2258
        %v2300 = vmul.f32 %v1867, %v2258
        %v2301 = vmul.f32 %v1868, %v2263
        %v2302 = vmul.f32 %v1869, %v2263
        %v2303 = vmul.f32 %v1870, %v2268
        %v2304 = vmul.f32 %v1871, %v2268
        %v2305 = vmul.f32 %v1872, %v2273
        %v2306 = vmul.f32 %v1873, %v2273
        %s2307 = scalar_lea.vmem %s174, 768 [#allocation8]
        %2308 = vst [vmem:[%s2307] sm:$0xff] %v2275
        %2309 = vst [vmem:[%s2307 + $0x8] sm:$0xff] %v2276
        %2310 = vst [vmem:[%s2307 + $0x10] sm:$0xff] %v2277
        %2311 = vst [vmem:[%s2307 + $0x18] sm:$0xff] %v2278
        %2312 = vst [vmem:[%s2307 + $0x20] sm:$0xff] %v2279
        %2313 = vst [vmem:[%s2307 + $0x28] sm:$0xff] %v2280
        %2314 = vst [vmem:[%s2307 + $0x30] sm:$0xff] %v2281
        %2315 = vst [vmem:[%s2307 + $0x38] sm:$0xff] %v2282
        %2316 = vst [vmem:[%s2307 + $0x40] sm:$0xff] %v2283
        %2317 = vst [vmem:[%s2307 + $0x48] sm:$0xff] %v2284
        %2318 = vst [vmem:[%s2307 + $0x50] sm:$0xff] %v2285
        %2319 = vst [vmem:[%s2307 + $0x58] sm:$0xff] %v2286
        %2320 = vst [vmem:[%s2307 + $0x60] sm:$0xff] %v2287
        %2321 = vst [vmem:[%s2307 + $0x68] sm:$0xff] %v2288
        %2322 = vst [vmem:[%s2307 + $0x70] sm:$0xff] %v2289
        %2323 = vst [vmem:[%s2307 + $0x78] sm:$0xff] %v2290
        %2324 = vst [vmem:[%s2307 + $0x80] sm:$0xff] %v2291
        %2325 = vst [vmem:[%s2307 + $0x88] sm:$0xff] %v2292
        %2326 = vst [vmem:[%s2307 + $0x90] sm:$0xff] %v2293
        %2327 = vst [vmem:[%s2307 + $0x98] sm:$0xff] %v2294
        %2328 = vst [vmem:[%s2307 + $0xa0] sm:$0xff] %v2295
        %2329 = vst [vmem:[%s2307 + $0xa8] sm:$0xff] %v2296
        %2330 = vst [vmem:[%s2307 + $0xb0] sm:$0xff] %v2297
        %2331 = vst [vmem:[%s2307 + $0xb8] sm:$0xff] %v2298
        %2332 = vst [vmem:[%s2307 + $0xc0] sm:$0xff] %v2299
        %2333 = vst [vmem:[%s2307 + $0xc8] sm:$0xff] %v2300
        %2334 = vst [vmem:[%s2307 + $0xd0] sm:$0xff] %v2301
        %2335 = vst [vmem:[%s2307 + $0xd8] sm:$0xff] %v2302
        %2336 = vst [vmem:[%s2307 + $0xe0] sm:$0xff] %v2303
        %2337 = vst [vmem:[%s2307 + $0xe8] sm:$0xff] %v2304
        %2338 = vst [vmem:[%s2307 + $0xf0] sm:$0xff] %v2305
        %2339 = vst [vmem:[%s2307 + $0xf8] sm:$0xff] %v2306
        %s2340 = sand.u32 %s75, 1
        %s2341 = scalar_lea.sflag [#allocation5], %s2340
        %s2342 = sand.u32 %s75, 1
        %s2343 = smul.addr %s2342, 1024
        %s2344 = scalar_lea.vmem [#allocation8], %s2343
        // Predicated region
        $region37: #{tpu_custom_call.1} parent=27 // pred_check
          %p2345 = pneg %p85
        $region38: #{tpu_custom_call.1} parent=27 // pred_check_branch
          %2347 = sbr.rel (%p2345) target = $region40
        $region39: #{tpu_custom_call.1} parent=27 // pred_region
          %s2348 = smul.u32 4, %s20
          %s2350 = ssub.s32 16384, 16384
          %2351 = vsyncadd %s2341, %s2350
          %s2352 = smul.addr %s2348, 32
          %s2353 = smul.addr %s2352, 128
          %s2354 = scalar_lea.hbm %s2, %s2353
          %s2355 = sshll.u32 %s2344, 4
          %s2356 = int_to_ptr.vmem [resolvable:$true] %s2355
          %2361 = dma.vmem_to_hbm [thread:$0]  %s2356, 16384, %s2354, %s2341, 256, 256, 16
        $region40: #{tpu_custom_call.1} parent=27 // pred_fallthru
          _
      $region28: #{tpu_custom_call.1} parent=5 // pred_fallthru
        _
      %p2362 = scmp.le.s32.totalorder 2, %s15
      // Predicated region
      $region41: #{tpu_custom_call.1} parent=5 // pred_check
        %p2363 = pneg %p2362
      $region42: #{tpu_custom_call.1} parent=5 // pred_check_branch
        %2365 = sbr.rel (%p2363) target = $region44
      $region43: #{tpu_custom_call.1} parent=5 // pred_region
        %s2366 = ssub.s32 %s15, 2
        // Predicated region
        $region45: #{tpu_custom_call.1} parent=43 // pred_check
          %p2367 = pneg %p91
        $region46: #{tpu_custom_call.1} parent=43 // pred_check_branch
          %2369 = sbr.rel (%p2367) target = $region48
        $region47: #{tpu_custom_call.1} parent=43 // pred_region
          %s2370 = sand.u32 %s76, 1
          %s2371 = scalar_lea.sflag [#allocation5], %s2370
          %s2372 = sand.u32 %s76, 1
          %s2373 = smul.addr %s2372, 1024
          %s2374 = scalar_lea.vmem [#allocation8], %s2373
          %2375 = dma.done %s2371, 16384
        $region48: #{tpu_custom_call.1} parent=43 // pred_fallthru
          _
      $region44: #{tpu_custom_call.1} parent=5 // pred_fallthru
        _
    $region6: #{tpu_custom_call.1} parent=1 // loop_footer
      %s19 = sadd.s32 1, %s15
    $region7: #{tpu_custom_call.1} parent=1 // loop_footer_branch
      %14 = sbr.rel target = $region3
    $region8: #{tpu_custom_call.1} parent=1 // loop_exit
      _
    %2376 = vsyncpa [#allocation4], 1
    %s2377 = scalar_lea.sflag [#allocation4], 1
    %2378 = vsyncpa %s2377, 1
    %2379 = vsyncpa [#allocation5], 1
    %s2380 = scalar_lea.sflag [#allocation5], 1
    %2381 = vsyncpa %s2380, 1
    %2382 = vsyncpa [#allocation6], 1
    %s2383 = scalar_lea.sflag [#allocation6], 1
    %2384 = vsyncpa %s2383, 1

</llo_original>
